<compile_context>
chip_gen: v7x
topology: tpu7x:2x2x1
jax: 0.10.0
libtpu: 0.0.40
codegen_flags: <defaults>
</compile_context>

<pallas_src>
import functools
import numpy as np

import jax
import jax.numpy as jnp
from jax import lax
from jax.experimental import pallas as pl
from jax.experimental.pallas import tpu as pltpu

RELU_A = 0.01  # LeakyReLU negative slope
K = 5          # merged conv operates in the 5x5 tap frame


def _lrelu(x):
    return jnp.where(x > 0, x, RELU_A * x)


def inception_kernel(x_ref, wcat_ref, w35_ref, b35_ref, mask_ref, out_ref, *,
                     C4, H, W):
    # x_ref:    (Cin+1, L) bf16   L = B*HW lanes; last channel is constant 1
    #                             (folds the 1x1 biases into the matmul).
    # wcat_ref: (3*C4, Cin+1) bf16  rows = [w3a; w5a; w1], last col = bias.
    # w35_ref:  (5, 2*C4, 5*2*C4) bf16  merged 3x3/5x5 weight, grouped per kh.
    # b35_ref:  (2*C4, 1) f32      [b3; b5]
    # mask_ref: (25, 1, L) f32     per-tap "same"-padding border masks.
    # out_ref:  (4*C4, L) f32
    L = x_ref.shape[1]

    # ---- fused 1x1 convs: one bf16 MXU op, biases folded via ones channel ---
    h_all = _lrelu(jnp.dot(wcat_ref[...], x_ref[...],
                           preferred_element_type=jnp.float32))   # (3*C4, L) f32
    h35 = h_all[0:2 * C4]           # [h3a; h5a] — one (8,128)-aligned tile
    h1 = h_all[2 * C4:3 * C4]       # branch 1 (reused verbatim as branch 4)

    # ---- merged 3x3 + 5x5 conv: per-kh chunked im2col matmul accumulation ---
    # Tap (dh, dw): lane rotation (XLU slot) + precomputed border mask (VPU).
    # Cross-image wrap-around of the roll only hits masked (zeroed) lanes.
    acc = None
    for kh in range(K):
        dh = kh - K // 2
        taps = []
        for kw in range(K):
            dw = kw - K // 2
            t_idx = kh * K + kw
            shift = (-(dh * W + dw)) % L
            t = pltpu.roll(h35, shift, axis=1) if shift != 0 else h35
            if dh != 0 or dw != 0:
                t = t * mask_ref[t_idx]          # (1, L) broadcast over sublanes
            taps.append(t)
        # 5 taps of a full 8-sublane slab -> clean (5*2*C4, L) stack; cast the
        # chunk to bf16 only at the MXU boundary (elementwise math stays f32).
        chunk = jnp.concatenate(taps, axis=0).astype(jnp.bfloat16)
        part = jnp.dot(w35_ref[kh], chunk, preferred_element_type=jnp.float32)
        acc = part if acc is None else acc + part
    h35_out = _lrelu(acc + b35_ref[...])          # (2*C4, L): [h3; h5]

    # ---- single wide, unmasked output store: [b1, b3, b5, b1] ---------------
    out = jnp.concatenate([h1, h35_out, h1], axis=0)
    out_ref[...] = out.astype(out_ref.dtype)


def _pick_batch_per_step(n):
    # Amortize per-step pipeline/tap overhead over several images while keeping
    # >= 2 "parallel" grid steps (v7x dual TensorCores) and modest vreg/VMEM use.
    cap = max(1, min(n // 2, 4))
    for d in range(cap, 0, -1):
        if n % d == 0:
            return d
    return 1


def inception_box_forward(x_nchw, params, *, batch_per_step=None):
    """x_nchw: (N, Cin, H, W) float32 -> (N, o_ch, H, W) float32."""
    N, Cin, H, W = x_nchw.shape
    C4 = params["w1"].shape[0]
    o_ch = 4 * C4
    HW = H * W

    B = _pick_batch_per_step(N) if batch_per_step is None else batch_per_step
    assert N % B == 0
    L = B * HW

    # ---- fold the batch into the lane axis: (N,Cin,H,W) -> (Cin, N*HW) ------
    x_flat = jnp.transpose(x_nchw.reshape(N, Cin, HW), (1, 0, 2)).reshape(Cin, N * HW)
    ones = jnp.ones((1, N * HW), x_flat.dtype)
    x_aug = jnp.concatenate([x_flat, ones], axis=0).astype(jnp.bfloat16)  # (Cin+1, N*HW)

    # ---- fused 1x1 weights: rows [w3a; w5a; w1], bias folded as last column --
    def _wb(wk, bk):
        return jnp.concatenate([params[wk].reshape(C4, Cin),
                                params[bk].reshape(C4, 1)], axis=1)
    wcat = jnp.concatenate([_wb("w3a", "b3a"), _wb("w5a", "b5a"),
                            _wb("w1", "b1")], axis=0).astype(jnp.bfloat16)  # (3*C4, Cin+1)

    # ---- merged 3x3/5x5 weight: (5, 2*C4, 5*2*C4), zero outside each branch --
    w5r = jnp.transpose(params["w5"], (0, 2, 3, 1)).reshape(C4, K * K, C4)
    w3r = jnp.pad(jnp.transpose(params["w3"], (0, 2, 3, 1)),
                  ((0, 0), (1, 1), (1, 1), (0, 0))).reshape(C4, K * K, C4)
    w35 = jnp.zeros((2 * C4, K * K, 2 * C4), jnp.float32)
    w35 = w35.at[:C4, :, :C4].set(w3r)      # 3x3 branch (padded to 5x5 frame)
    w35 = w35.at[C4:, :, C4:].set(w5r)      # 5x5 branch
    w35 = jnp.transpose(w35.reshape(2 * C4, K, K, 2 * C4), (1, 0, 2, 3)) \
             .reshape(K, 2 * C4, K * 2 * C4).astype(jnp.bfloat16)
    b35 = jnp.concatenate([params["b3"], params["b5"]]).reshape(2 * C4, 1) \
             .astype(jnp.float32)

    # ---- static border-mask table (25, 1, L): periodic per image ------------
    yy, xx = np.arange(HW) // W, np.arange(HW) % W
    rows = []
    for kh in range(K):
        dh = kh - K // 2
        for kw in range(K):
            dw = kw - K // 2
            rows.append((yy + dh >= 0) & (yy + dh < H) & (xx + dw >= 0) & (xx + dw < W))
    mask_tbl = jnp.asarray(
        np.tile(np.stack(rows).astype(np.float32), (1, B)).reshape(K * K, 1, L))

    out_flat = pl.pallas_call(
        functools.partial(inception_kernel, C4=C4, H=H, W=W),
        out_shape=jax.ShapeDtypeStruct((o_ch, N * HW), jnp.float32),
        grid_spec=pltpu.PrefetchScalarGridSpec(
            num_scalar_prefetch=0,
            grid=(N // B,),
            in_specs=[
                pl.BlockSpec((Cin + 1, L), lambda b: (0, b)),
                pl.BlockSpec(wcat.shape, lambda b: (0, 0)),
                pl.BlockSpec(w35.shape, lambda b: (0, 0, 0)),
                pl.BlockSpec(b35.shape, lambda b: (0, 0)),
                pl.BlockSpec(mask_tbl.shape, lambda b: (0, 0, 0)),
            ],
            out_specs=pl.BlockSpec((o_ch, L), lambda b: (0, b)),
        ),
        compiler_params=pltpu.CompilerParams(
            dimension_semantics=("parallel",)),
    )(x_aug, wcat, w35, b35, mask_tbl)

    # (o_ch, N*HW) -> NCHW (pure layout plumbing).
    return jnp.transpose(out_flat.reshape(o_ch, N, HW), (1, 0, 2)) \
              .reshape(N, o_ch, H, W)


# -------------------- pure-JAX reference (correctness check) --------------------
def _ref_forward(x, params):
    def conv(h, w, b, pad):
        y = lax.conv_general_dilated(
            h, w, window_strides=(1, 1),
            padding=((pad, pad), (pad, pad)),
            dimension_numbers=("NCHW", "OIHW", "NCHW"),
            precision=lax.Precision.HIGHEST)
        return _lrelu(y + b.reshape(1, -1, 1, 1))

    b1 = conv(x, params["w1"], params["b1"], 0)
    b3 = conv(conv(x, params["w3a"], params["b3a"], 0),
              params["w3"], params["b3"], 1)
    b5 = conv(conv(x, params["w5a"], params["b5a"], 0),
              params["w5"], params["b5"], 2)
    return jnp.concatenate([b1, b3, b5, b1], axis=1)  # branch 4 == branch 1


def init_params(key, in_ch, o_ch):
    assert o_ch % 4 == 0
    c4 = o_ch // 4
    ks = jax.random.split(key, 10)
    s = 0.1
    return {  # PyTorch conventions: weights OIHW, biases (Cout,)
        "w1":  s * jax.random.normal(ks[0], (c4, in_ch, 1, 1), jnp.float32),
        "b1":  s * jax.random.normal(ks[1], (c4,), jnp.float32),
        "w3a": s * jax.random.normal(ks[2], (c4, in_ch, 1, 1), jnp.float32),
        "b3a": s * jax.random.normal(ks[3], (c4,), jnp.float32),
        "w3":  s * jax.random.normal(ks[4], (c4, c4, 3, 3), jnp.float32),
        "b3":  s * jax.random.normal(ks[5], (c4,), jnp.float32),
        "w5a": s * jax.random.normal(ks[6], (c4, in_ch, 1, 1), jnp.float32),
        "b5a": s * jax.random.normal(ks[7], (c4,), jnp.float32),
        "w5":  s * jax.random.normal(ks[8], (c4, c4, 5, 5), jnp.float32),
        "b5":  s * jax.random.normal(ks[9], (c4,), jnp.float32),
    }


if __name__ == "__main__":
    key = jax.random.PRNGKey(0)
    k_x, k_p = jax.random.split(key)

    N, in_ch, H, W = 2, 4, 16, 16
    o_ch = 16
    x = jax.random.normal(k_x, (N, in_ch, H, W), jnp.float32)
    params = init_params(k_p, in_ch, o_ch)

    out = jax.block_until_ready(inception_box_forward(x, params))
    ref = jax.block_until_ready(_ref_forward(x, params))

    assert out.shape == (N, o_ch, H, W)
    # Relaxed tolerance: MXU inputs are bf16 (f32 accumulation); the f32
    # reference therefore differs by bf16 rounding only (<< 1e-2 here).
    np.testing.assert_allclose(np.asarray(out), np.asarray(ref),
                               rtol=5e-2, atol=2e-2)
    print("KERNEL_OK")
</pallas_src>

<mosaic_0001>
module attributes {stable_mosaic.version = 11 : i64} {
  func.func @inception_kernel(%arg0: i32, %arg1: memref<5x256xbf16, #tpu.memory_space<vmem>>, %arg2: memref<12x5xbf16, #tpu.memory_space<vmem>>, %arg3: memref<5x8x40xbf16, #tpu.memory_space<vmem>>, %arg4: memref<8x1xf32, #tpu.memory_space<vmem>>, %arg5: memref<25x1x256xf32, #tpu.memory_space<vmem>>, %arg6: memref<16x256xf32, #tpu.memory_space<vmem>>) attributes {dimension_semantics = [#tpu.dimension_semantics<parallel>], iteration_bounds = array<i64: 2>, scalar_prefetch = 0 : i64, scratch_operands = 0 : i64, tpu.core_type = #tpu.core_type<tc>, window_params = [{transform_indices = @transform_0, window_bounds = array<i64: 5, 256>}, {pipeline_mode = #tpu.pipeline_mode<synchronous>, transform_indices = @transform_1, window_bounds = array<i64: 12, 5>}, {pipeline_mode = #tpu.pipeline_mode<synchronous>, transform_indices = @transform_2, window_bounds = array<i64: 5, 8, 40>}, {pipeline_mode = #tpu.pipeline_mode<synchronous>, transform_indices = @transform_3, window_bounds = array<i64: 8, 1>}, {pipeline_mode = #tpu.pipeline_mode<synchronous>, transform_indices = @transform_4, window_bounds = array<i64: 25, 1, 256>}, {transform_indices = @transform_5, window_bounds = array<i64: 16, 256>}]} {
    %c0 = arith.constant 0 : index
    %c0_0 = arith.constant 0 : index
    %0 = vector.load %arg2[%c0, %c0_0] : memref<12x5xbf16, #tpu.memory_space<vmem>>, vector<12x5xbf16>
    %c0_1 = arith.constant 0 : index
    %c0_2 = arith.constant 0 : index
    %1 = vector.load %arg1[%c0_1, %c0_2] : memref<5x256xbf16, #tpu.memory_space<vmem>>, vector<5x256xbf16>
    %cst = arith.constant dense<0.000000e+00> : vector<12x256xf32>
    %2 = tpu.matmul %0, %1, %cst {dimension_numbers = #tpu.dot_dimension_numbers<[1], [0], [0], [1], [0, 0, 1, 1], [], []>} : vector<12x5xbf16>, vector<5x256xbf16>, vector<12x256xf32> -> vector<12x256xf32>
    %cst_3 = arith.constant 0.000000e+00 : f32
    %3 = vector.broadcast %cst_3 : f32 to vector<12x256xf32>
    %4 = arith.cmpf ogt, %2, %3 : vector<12x256xf32>
    %cst_4 = arith.constant 0.00999999977 : f32
    %5 = vector.broadcast %cst_4 : f32 to vector<12x256xf32>
    %6 = arith.mulf %5, %2 : vector<12x256xf32>
    %7 = arith.select %4, %2, %6 : vector<12x256xi1>, vector<12x256xf32>
    %8 = vector.extract_strided_slice %7 {offsets = [0, 0], sizes = [8, 256], strides = [1, 1]} : vector<12x256xf32> to vector<8x256xf32>
    %9 = vector.extract_strided_slice %7 {offsets = [8, 0], sizes = [4, 256], strides = [1, 1]} : vector<12x256xf32> to vector<4x256xf32>
    %c34_i32 = arith.constant 34 : i32
    %10 = tpu.dynamic_rotate %8 by %c34_i32 dim 1 : vector<8x256xf32>, i32 -> vector<8x256xf32>
    %c0_5 = arith.constant 0 : index
    %c0_6 = arith.constant 0 : index
    %c0_7 = arith.constant 0 : index
    %11 = vector.load %arg5[%c0_5, %c0_6, %c0_7] : memref<25x1x256xf32, #tpu.memory_space<vmem>>, vector<1x1x256xf32>
    %12 = vector.shape_cast %11 : vector<1x1x256xf32> to vector<1x256xf32>
    %13 = vector.broadcast %12 : vector<1x256xf32> to vector<8x256xf32>
    %14 = arith.mulf %10, %13 : vector<8x256xf32>
    %c33_i32 = arith.constant 33 : i32
    %15 = tpu.dynamic_rotate %8 by %c33_i32 dim 1 : vector<8x256xf32>, i32 -> vector<8x256xf32>
    %c1 = arith.constant 1 : index
    %c0_8 = arith.constant 0 : index
    %c0_9 = arith.constant 0 : index
    %16 = vector.load %arg5[%c1, %c0_8, %c0_9] : memref<25x1x256xf32, #tpu.memory_space<vmem>>, vector<1x1x256xf32>
    %17 = vector.shape_cast %16 : vector<1x1x256xf32> to vector<1x256xf32>
    %18 = vector.broadcast %17 : vector<1x256xf32> to vector<8x256xf32>
    %19 = arith.mulf %15, %18 : vector<8x256xf32>
    %c32_i32 = arith.constant 32 : i32
    %20 = tpu.dynamic_rotate %8 by %c32_i32 dim 1 : vector<8x256xf32>, i32 -> vector<8x256xf32>
    %c2 = arith.constant 2 : index
    %c0_10 = arith.constant 0 : index
    %c0_11 = arith.constant 0 : index
    %21 = vector.load %arg5[%c2, %c0_10, %c0_11] : memref<25x1x256xf32, #tpu.memory_space<vmem>>, vector<1x1x256xf32>
    %22 = vector.shape_cast %21 : vector<1x1x256xf32> to vector<1x256xf32>
    %23 = vector.broadcast %22 : vector<1x256xf32> to vector<8x256xf32>
    %24 = arith.mulf %20, %23 : vector<8x256xf32>
    %c31_i32 = arith.constant 31 : i32
    %25 = tpu.dynamic_rotate %8 by %c31_i32 dim 1 : vector<8x256xf32>, i32 -> vector<8x256xf32>
    %c3 = arith.constant 3 : index
    %c0_12 = arith.constant 0 : index
    %c0_13 = arith.constant 0 : index
    %26 = vector.load %arg5[%c3, %c0_12, %c0_13] : memref<25x1x256xf32, #tpu.memory_space<vmem>>, vector<1x1x256xf32>
    %27 = vector.shape_cast %26 : vector<1x1x256xf32> to vector<1x256xf32>
    %28 = vector.broadcast %27 : vector<1x256xf32> to vector<8x256xf32>
    %29 = arith.mulf %25, %28 : vector<8x256xf32>
    %c30_i32 = arith.constant 30 : i32
    %30 = tpu.dynamic_rotate %8 by %c30_i32 dim 1 : vector<8x256xf32>, i32 -> vector<8x256xf32>
    %c4 = arith.constant 4 : index
    %c0_14 = arith.constant 0 : index
    %c0_15 = arith.constant 0 : index
    %31 = vector.load %arg5[%c4, %c0_14, %c0_15] : memref<25x1x256xf32, #tpu.memory_space<vmem>>, vector<1x1x256xf32>
    %32 = vector.shape_cast %31 : vector<1x1x256xf32> to vector<1x256xf32>
    %33 = vector.broadcast %32 : vector<1x256xf32> to vector<8x256xf32>
    %34 = arith.mulf %30, %33 : vector<8x256xf32>
    %35 = tpu.concatenate %14, %19, %24, %29, %34 in 0 : vector<8x256xf32>, vector<8x256xf32>, vector<8x256xf32>, vector<8x256xf32>, vector<8x256xf32> -> vector<40x256xf32>
    %36 = arith.truncf %35 : vector<40x256xf32> to vector<40x256xbf16>
    %c0_16 = arith.constant 0 : index
    %c0_17 = arith.constant 0 : index
    %c0_18 = arith.constant 0 : index
    %37 = vector.load %arg3[%c0_16, %c0_17, %c0_18] : memref<5x8x40xbf16, #tpu.memory_space<vmem>>, vector<1x8x40xbf16>
    %38 = vector.shape_cast %37 : vector<1x8x40xbf16> to vector<8x40xbf16>
    %cst_19 = arith.constant dense<0.000000e+00> : vector<8x256xf32>
    %39 = tpu.matmul %38, %36, %cst_19 {dimension_numbers = #tpu.dot_dimension_numbers<[1], [0], [0], [1], [0, 0, 1, 1], [], []>} : vector<8x40xbf16>, vector<40x256xbf16>, vector<8x256xf32> -> vector<8x256xf32>
    %c18_i32 = arith.constant 18 : i32
    %40 = tpu.dynamic_rotate %8 by %c18_i32 dim 1 : vector<8x256xf32>, i32 -> vector<8x256xf32>
    %c5 = arith.constant 5 : index
    %c0_20 = arith.constant 0 : index
    %c0_21 = arith.constant 0 : index
    %41 = vector.load %arg5[%c5, %c0_20, %c0_21] : memref<25x1x256xf32, #tpu.memory_space<vmem>>, vector<1x1x256xf32>
    %42 = vector.shape_cast %41 : vector<1x1x256xf32> to vector<1x256xf32>
    %43 = vector.broadcast %42 : vector<1x256xf32> to vector<8x256xf32>
    %44 = arith.mulf %40, %43 : vector<8x256xf32>
    %c17_i32 = arith.constant 17 : i32
    %45 = tpu.dynamic_rotate %8 by %c17_i32 dim 1 : vector<8x256xf32>, i32 -> vector<8x256xf32>
    %c6 = arith.constant 6 : index
    %c0_22 = arith.constant 0 : index
    %c0_23 = arith.constant 0 : index
    %46 = vector.load %arg5[%c6, %c0_22, %c0_23] : memref<25x1x256xf32, #tpu.memory_space<vmem>>, vector<1x1x256xf32>
    %47 = vector.shape_cast %46 : vector<1x1x256xf32> to vector<1x256xf32>
    %48 = vector.broadcast %47 : vector<1x256xf32> to vector<8x256xf32>
    %49 = arith.mulf %45, %48 : vector<8x256xf32>
    %c16_i32 = arith.constant 16 : i32
    %50 = tpu.dynamic_rotate %8 by %c16_i32 dim 1 : vector<8x256xf32>, i32 -> vector<8x256xf32>
    %c7 = arith.constant 7 : index
    %c0_24 = arith.constant 0 : index
    %c0_25 = arith.constant 0 : index
    %51 = vector.load %arg5[%c7, %c0_24, %c0_25] : memref<25x1x256xf32, #tpu.memory_space<vmem>>, vector<1x1x256xf32>
    %52 = vector.shape_cast %51 : vector<1x1x256xf32> to vector<1x256xf32>
    %53 = vector.broadcast %52 : vector<1x256xf32> to vector<8x256xf32>
    %54 = arith.mulf %50, %53 : vector<8x256xf32>
    %c15_i32 = arith.constant 15 : i32
    %55 = tpu.dynamic_rotate %8 by %c15_i32 dim 1 : vector<8x256xf32>, i32 -> vector<8x256xf32>
    %c8 = arith.constant 8 : index
    %c0_26 = arith.constant 0 : index
    %c0_27 = arith.constant 0 : index
    %56 = vector.load %arg5[%c8, %c0_26, %c0_27] : memref<25x1x256xf32, #tpu.memory_space<vmem>>, vector<1x1x256xf32>
    %57 = vector.shape_cast %56 : vector<1x1x256xf32> to vector<1x256xf32>
    %58 = vector.broadcast %57 : vector<1x256xf32> to vector<8x256xf32>
    %59 = arith.mulf %55, %58 : vector<8x256xf32>
    %c14_i32 = arith.constant 14 : i32
    %60 = tpu.dynamic_rotate %8 by %c14_i32 dim 1 : vector<8x256xf32>, i32 -> vector<8x256xf32>
    %c9 = arith.constant 9 : index
    %c0_28 = arith.constant 0 : index
    %c0_29 = arith.constant 0 : index
    %61 = vector.load %arg5[%c9, %c0_28, %c0_29] : memref<25x1x256xf32, #tpu.memory_space<vmem>>, vector<1x1x256xf32>
    %62 = vector.shape_cast %61 : vector<1x1x256xf32> to vector<1x256xf32>
    %63 = vector.broadcast %62 : vector<1x256xf32> to vector<8x256xf32>
    %64 = arith.mulf %60, %63 : vector<8x256xf32>
    %65 = tpu.concatenate %44, %49, %54, %59, %64 in 0 : vector<8x256xf32>, vector<8x256xf32>, vector<8x256xf32>, vector<8x256xf32>, vector<8x256xf32> -> vector<40x256xf32>
    %66 = arith.truncf %65 : vector<40x256xf32> to vector<40x256xbf16>
    %c1_30 = arith.constant 1 : index
    %c0_31 = arith.constant 0 : index
    %c0_32 = arith.constant 0 : index
    %67 = vector.load %arg3[%c1_30, %c0_31, %c0_32] : memref<5x8x40xbf16, #tpu.memory_space<vmem>>, vector<1x8x40xbf16>
    %68 = vector.shape_cast %67 : vector<1x8x40xbf16> to vector<8x40xbf16>
    %cst_33 = arith.constant dense<0.000000e+00> : vector<8x256xf32>
    %69 = tpu.matmul %68, %66, %cst_33 {dimension_numbers = #tpu.dot_dimension_numbers<[1], [0], [0], [1], [0, 0, 1, 1], [], []>} : vector<8x40xbf16>, vector<40x256xbf16>, vector<8x256xf32> -> vector<8x256xf32>
    %70 = arith.addf %39, %69 : vector<8x256xf32>
    %c2_i32 = arith.constant 2 : i32
    %71 = tpu.dynamic_rotate %8 by %c2_i32 dim 1 : vector<8x256xf32>, i32 -> vector<8x256xf32>
    %c10 = arith.constant 10 : index
    %c0_34 = arith.constant 0 : index
    %c0_35 = arith.constant 0 : index
    %72 = vector.load %arg5[%c10, %c0_34, %c0_35] : memref<25x1x256xf32, #tpu.memory_space<vmem>>, vector<1x1x256xf32>
    %73 = vector.shape_cast %72 : vector<1x1x256xf32> to vector<1x256xf32>
    %74 = vector.broadcast %73 : vector<1x256xf32> to vector<8x256xf32>
    %75 = arith.mulf %71, %74 : vector<8x256xf32>
    %c1_i32 = arith.constant 1 : i32
    %76 = tpu.dynamic_rotate %8 by %c1_i32 dim 1 : vector<8x256xf32>, i32 -> vector<8x256xf32>
    %c11 = arith.constant 11 : index
    %c0_36 = arith.constant 0 : index
    %c0_37 = arith.constant 0 : index
    %77 = vector.load %arg5[%c11, %c0_36, %c0_37] : memref<25x1x256xf32, #tpu.memory_space<vmem>>, vector<1x1x256xf32>
    %78 = vector.shape_cast %77 : vector<1x1x256xf32> to vector<1x256xf32>
    %79 = vector.broadcast %78 : vector<1x256xf32> to vector<8x256xf32>
    %80 = arith.mulf %76, %79 : vector<8x256xf32>
    %c255_i32 = arith.constant 255 : i32
    %81 = tpu.dynamic_rotate %8 by %c255_i32 dim 1 : vector<8x256xf32>, i32 -> vector<8x256xf32>
    %c13 = arith.constant 13 : index
    %c0_38 = arith.constant 0 : index
    %c0_39 = arith.constant 0 : index
    %82 = vector.load %arg5[%c13, %c0_38, %c0_39] : memref<25x1x256xf32, #tpu.memory_space<vmem>>, vector<1x1x256xf32>
    %83 = vector.shape_cast %82 : vector<1x1x256xf32> to vector<1x256xf32>
    %84 = vector.broadcast %83 : vector<1x256xf32> to vector<8x256xf32>
    %85 = arith.mulf %81, %84 : vector<8x256xf32>
    %c254_i32 = arith.constant 254 : i32
    %86 = tpu.dynamic_rotate %8 by %c254_i32 dim 1 : vector<8x256xf32>, i32 -> vector<8x256xf32>
    %c14 = arith.constant 14 : index
    %c0_40 = arith.constant 0 : index
    %c0_41 = arith.constant 0 : index
    %87 = vector.load %arg5[%c14, %c0_40, %c0_41] : memref<25x1x256xf32, #tpu.memory_space<vmem>>, vector<1x1x256xf32>
    %88 = vector.shape_cast %87 : vector<1x1x256xf32> to vector<1x256xf32>
    %89 = vector.broadcast %88 : vector<1x256xf32> to vector<8x256xf32>
    %90 = arith.mulf %86, %89 : vector<8x256xf32>
    %91 = tpu.concatenate %75, %80, %8, %85, %90 in 0 : vector<8x256xf32>, vector<8x256xf32>, vector<8x256xf32>, vector<8x256xf32>, vector<8x256xf32> -> vector<40x256xf32>
    %92 = arith.truncf %91 : vector<40x256xf32> to vector<40x256xbf16>
    %c2_42 = arith.constant 2 : index
    %c0_43 = arith.constant 0 : index
    %c0_44 = arith.constant 0 : index
    %93 = vector.load %arg3[%c2_42, %c0_43, %c0_44] : memref<5x8x40xbf16, #tpu.memory_space<vmem>>, vector<1x8x40xbf16>
    %94 = vector.shape_cast %93 : vector<1x8x40xbf16> to vector<8x40xbf16>
    %cst_45 = arith.constant dense<0.000000e+00> : vector<8x256xf32>
    %95 = tpu.matmul %94, %92, %cst_45 {dimension_numbers = #tpu.dot_dimension_numbers<[1], [0], [0], [1], [0, 0, 1, 1], [], []>} : vector<8x40xbf16>, vector<40x256xbf16>, vector<8x256xf32> -> vector<8x256xf32>
    %96 = arith.addf %70, %95 : vector<8x256xf32>
    %c242_i32 = arith.constant 242 : i32
    %97 = tpu.dynamic_rotate %8 by %c242_i32 dim 1 : vector<8x256xf32>, i32 -> vector<8x256xf32>
    %c15 = arith.constant 15 : index
    %c0_46 = arith.constant 0 : index
    %c0_47 = arith.constant 0 : index
    %98 = vector.load %arg5[%c15, %c0_46, %c0_47] : memref<25x1x256xf32, #tpu.memory_space<vmem>>, vector<1x1x256xf32>
    %99 = vector.shape_cast %98 : vector<1x1x256xf32> to vector<1x256xf32>
    %100 = vector.broadcast %99 : vector<1x256xf32> to vector<8x256xf32>
    %101 = arith.mulf %97, %100 : vector<8x256xf32>
    %c241_i32 = arith.constant 241 : i32
    %102 = tpu.dynamic_rotate %8 by %c241_i32 dim 1 : vector<8x256xf32>, i32 -> vector<8x256xf32>
    %c16 = arith.constant 16 : index
    %c0_48 = arith.constant 0 : index
    %c0_49 = arith.constant 0 : index
    %103 = vector.load %arg5[%c16, %c0_48, %c0_49] : memref<25x1x256xf32, #tpu.memory_space<vmem>>, vector<1x1x256xf32>
    %104 = vector.shape_cast %103 : vector<1x1x256xf32> to vector<1x256xf32>
    %105 = vector.broadcast %104 : vector<1x256xf32> to vector<8x256xf32>
    %106 = arith.mulf %102, %105 : vector<8x256xf32>
    %c240_i32 = arith.constant 240 : i32
    %107 = tpu.dynamic_rotate %8 by %c240_i32 dim 1 : vector<8x256xf32>, i32 -> vector<8x256xf32>
    %c17 = arith.constant 17 : index
    %c0_50 = arith.constant 0 : index
    %c0_51 = arith.constant 0 : index
    %108 = vector.load %arg5[%c17, %c0_50, %c0_51] : memref<25x1x256xf32, #tpu.memory_space<vmem>>, vector<1x1x256xf32>
    %109 = vector.shape_cast %108 : vector<1x1x256xf32> to vector<1x256xf32>
    %110 = vector.broadcast %109 : vector<1x256xf32> to vector<8x256xf32>
    %111 = arith.mulf %107, %110 : vector<8x256xf32>
    %c239_i32 = arith.constant 239 : i32
    %112 = tpu.dynamic_rotate %8 by %c239_i32 dim 1 : vector<8x256xf32>, i32 -> vector<8x256xf32>
    %c18 = arith.constant 18 : index
    %c0_52 = arith.constant 0 : index
    %c0_53 = arith.constant 0 : index
    %113 = vector.load %arg5[%c18, %c0_52, %c0_53] : memref<25x1x256xf32, #tpu.memory_space<vmem>>, vector<1x1x256xf32>
    %114 = vector.shape_cast %113 : vector<1x1x256xf32> to vector<1x256xf32>
    %115 = vector.broadcast %114 : vector<1x256xf32> to vector<8x256xf32>
    %116 = arith.mulf %112, %115 : vector<8x256xf32>
    %c238_i32 = arith.constant 238 : i32
    %117 = tpu.dynamic_rotate %8 by %c238_i32 dim 1 : vector<8x256xf32>, i32 -> vector<8x256xf32>
    %c19 = arith.constant 19 : index
    %c0_54 = arith.constant 0 : index
    %c0_55 = arith.constant 0 : index
    %118 = vector.load %arg5[%c19, %c0_54, %c0_55] : memref<25x1x256xf32, #tpu.memory_space<vmem>>, vector<1x1x256xf32>
    %119 = vector.shape_cast %118 : vector<1x1x256xf32> to vector<1x256xf32>
    %120 = vector.broadcast %119 : vector<1x256xf32> to vector<8x256xf32>
    %121 = arith.mulf %117, %120 : vector<8x256xf32>
    %122 = tpu.concatenate %101, %106, %111, %116, %121 in 0 : vector<8x256xf32>, vector<8x256xf32>, vector<8x256xf32>, vector<8x256xf32>, vector<8x256xf32> -> vector<40x256xf32>
    %123 = arith.truncf %122 : vector<40x256xf32> to vector<40x256xbf16>
    %c3_56 = arith.constant 3 : index
    %c0_57 = arith.constant 0 : index
    %c0_58 = arith.constant 0 : index
    %124 = vector.load %arg3[%c3_56, %c0_57, %c0_58] : memref<5x8x40xbf16, #tpu.memory_space<vmem>>, vector<1x8x40xbf16>
    %125 = vector.shape_cast %124 : vector<1x8x40xbf16> to vector<8x40xbf16>
    %cst_59 = arith.constant dense<0.000000e+00> : vector<8x256xf32>
    %126 = tpu.matmul %125, %123, %cst_59 {dimension_numbers = #tpu.dot_dimension_numbers<[1], [0], [0], [1], [0, 0, 1, 1], [], []>} : vector<8x40xbf16>, vector<40x256xbf16>, vector<8x256xf32> -> vector<8x256xf32>
    %127 = arith.addf %96, %126 : vector<8x256xf32>
    %c226_i32 = arith.constant 226 : i32
    %128 = tpu.dynamic_rotate %8 by %c226_i32 dim 1 : vector<8x256xf32>, i32 -> vector<8x256xf32>
    %c20 = arith.constant 20 : index
    %c0_60 = arith.constant 0 : index
    %c0_61 = arith.constant 0 : index
    %129 = vector.load %arg5[%c20, %c0_60, %c0_61] : memref<25x1x256xf32, #tpu.memory_space<vmem>>, vector<1x1x256xf32>
    %130 = vector.shape_cast %129 : vector<1x1x256xf32> to vector<1x256xf32>
    %131 = vector.broadcast %130 : vector<1x256xf32> to vector<8x256xf32>
    %132 = arith.mulf %128, %131 : vector<8x256xf32>
    %c225_i32 = arith.constant 225 : i32
    %133 = tpu.dynamic_rotate %8 by %c225_i32 dim 1 : vector<8x256xf32>, i32 -> vector<8x256xf32>
    %c21 = arith.constant 21 : index
    %c0_62 = arith.constant 0 : index
    %c0_63 = arith.constant 0 : index
    %134 = vector.load %arg5[%c21, %c0_62, %c0_63] : memref<25x1x256xf32, #tpu.memory_space<vmem>>, vector<1x1x256xf32>
    %135 = vector.shape_cast %134 : vector<1x1x256xf32> to vector<1x256xf32>
    %136 = vector.broadcast %135 : vector<1x256xf32> to vector<8x256xf32>
    %137 = arith.mulf %133, %136 : vector<8x256xf32>
    %c224_i32 = arith.constant 224 : i32
    %138 = tpu.dynamic_rotate %8 by %c224_i32 dim 1 : vector<8x256xf32>, i32 -> vector<8x256xf32>
    %c22 = arith.constant 22 : index
    %c0_64 = arith.constant 0 : index
    %c0_65 = arith.constant 0 : index
    %139 = vector.load %arg5[%c22, %c0_64, %c0_65] : memref<25x1x256xf32, #tpu.memory_space<vmem>>, vector<1x1x256xf32>
    %140 = vector.shape_cast %139 : vector<1x1x256xf32> to vector<1x256xf32>
    %141 = vector.broadcast %140 : vector<1x256xf32> to vector<8x256xf32>
    %142 = arith.mulf %138, %141 : vector<8x256xf32>
    %c223_i32 = arith.constant 223 : i32
    %143 = tpu.dynamic_rotate %8 by %c223_i32 dim 1 : vector<8x256xf32>, i32 -> vector<8x256xf32>
    %c23 = arith.constant 23 : index
    %c0_66 = arith.constant 0 : index
    %c0_67 = arith.constant 0 : index
    %144 = vector.load %arg5[%c23, %c0_66, %c0_67] : memref<25x1x256xf32, #tpu.memory_space<vmem>>, vector<1x1x256xf32>
    %145 = vector.shape_cast %144 : vector<1x1x256xf32> to vector<1x256xf32>
    %146 = vector.broadcast %145 : vector<1x256xf32> to vector<8x256xf32>
    %147 = arith.mulf %143, %146 : vector<8x256xf32>
    %c222_i32 = arith.constant 222 : i32
    %148 = tpu.dynamic_rotate %8 by %c222_i32 dim 1 : vector<8x256xf32>, i32 -> vector<8x256xf32>
    %c24 = arith.constant 24 : index
    %c0_68 = arith.constant 0 : index
    %c0_69 = arith.constant 0 : index
    %149 = vector.load %arg5[%c24, %c0_68, %c0_69] : memref<25x1x256xf32, #tpu.memory_space<vmem>>, vector<1x1x256xf32>
    %150 = vector.shape_cast %149 : vector<1x1x256xf32> to vector<1x256xf32>
    %151 = vector.broadcast %150 : vector<1x256xf32> to vector<8x256xf32>
    %152 = arith.mulf %148, %151 : vector<8x256xf32>
    %153 = tpu.concatenate %132, %137, %142, %147, %152 in 0 : vector<8x256xf32>, vector<8x256xf32>, vector<8x256xf32>, vector<8x256xf32>, vector<8x256xf32> -> vector<40x256xf32>
    %154 = arith.truncf %153 : vector<40x256xf32> to vector<40x256xbf16>
    %c4_70 = arith.constant 4 : index
    %c0_71 = arith.constant 0 : index
    %c0_72 = arith.constant 0 : index
    %155 = vector.load %arg3[%c4_70, %c0_71, %c0_72] : memref<5x8x40xbf16, #tpu.memory_space<vmem>>, vector<1x8x40xbf16>
    %156 = vector.shape_cast %155 : vector<1x8x40xbf16> to vector<8x40xbf16>
    %cst_73 = arith.constant dense<0.000000e+00> : vector<8x256xf32>
    %157 = tpu.matmul %156, %154, %cst_73 {dimension_numbers = #tpu.dot_dimension_numbers<[1], [0], [0], [1], [0, 0, 1, 1], [], []>} : vector<8x40xbf16>, vector<40x256xbf16>, vector<8x256xf32> -> vector<8x256xf32>
    %158 = arith.addf %127, %157 : vector<8x256xf32>
    %c0_74 = arith.constant 0 : index
    %c0_75 = arith.constant 0 : index
    %159 = vector.load %arg4[%c0_74, %c0_75] : memref<8x1xf32, #tpu.memory_space<vmem>>, vector<8x1xf32>
    %160 = vector.broadcast %159 : vector<8x1xf32> to vector<8x256xf32>
    %161 = arith.addf %158, %160 : vector<8x256xf32>
    %cst_76 = arith.constant 0.000000e+00 : f32
    %162 = vector.broadcast %cst_76 : f32 to vector<8x256xf32>
    %163 = arith.cmpf ogt, %161, %162 : vector<8x256xf32>
    %cst_77 = arith.constant 0.00999999977 : f32
    %164 = vector.broadcast %cst_77 : f32 to vector<8x256xf32>
    %165 = arith.mulf %164, %161 : vector<8x256xf32>
    %166 = arith.select %163, %161, %165 : vector<8x256xi1>, vector<8x256xf32>
    %167 = tpu.concatenate %9, %166, %9 in 0 : vector<4x256xf32>, vector<8x256xf32>, vector<4x256xf32> -> vector<16x256xf32>
    %c0_78 = arith.constant 0 : index
    %c0_79 = arith.constant 0 : index
    %168 = vector.load %arg6[%c0_78, %c0_79] : memref<16x256xf32, #tpu.memory_space<vmem>>, vector<16x256xf32>
    tpu.vector_store %arg6[%c0_78, %c0_79], %167 {strides = array<i32>} : memref<16x256xf32, #tpu.memory_space<vmem>>, vector<16x256xf32>,
    return
  }
  func.func @transform_0(%arg0: i32) -> (i32, i32) {
    %c0_i32 = arith.constant 0 : i32
    %c0_i32_0 = arith.constant 0 : i32
    return %c0_i32, %arg0 : i32, i32
  }
  func.func @transform_1(%arg0: i32) -> (i32, i32) {
    %c0_i32 = arith.constant 0 : i32
    %c0_i32_0 = arith.constant 0 : i32
    %c0_i32_1 = arith.constant 0 : i32
    return %c0_i32, %c0_i32_0 : i32, i32
  }
  func.func @transform_2(%arg0: i32) -> (i32, i32, i32) {
    %c0_i32 = arith.constant 0 : i32
    %c0_i32_0 = arith.constant 0 : i32
    %c0_i32_1 = arith.constant 0 : i32
    %c0_i32_2 = arith.constant 0 : i32
    return %c0_i32, %c0_i32_0, %c0_i32_1 : i32, i32, i32
  }
  func.func @transform_3(%arg0: i32) -> (i32, i32) {
    %c0_i32 = arith.constant 0 : i32
    %c0_i32_0 = arith.constant 0 : i32
    %c0_i32_1 = arith.constant 0 : i32
    return %c0_i32, %c0_i32_0 : i32, i32
  }
  func.func @transform_4(%arg0: i32) -> (i32, i32, i32) {
    %c0_i32 = arith.constant 0 : i32
    %c0_i32_0 = arith.constant 0 : i32
    %c0_i32_1 = arith.constant 0 : i32
    %c0_i32_2 = arith.constant 0 : i32
    return %c0_i32, %c0_i32_0, %c0_i32_1 : i32, i32, i32
  }
  func.func @transform_5(%arg0: i32) -> (i32, i32) {
    %c0_i32 = arith.constant 0 : i32
    %c0_i32_0 = arith.constant 0 : i32
    return %c0_i32, %arg0 : i32, i32
  }
}

</mosaic_0001>

<llo_original>
// kernel: tpu_custom_call.1
$region0: #{tpu_custom_call.1}
  #allocation0 [shape = 'u32[]', space=smem, size = 0x4, offset = 0x4, fixed_abs, tag = 'smem constant byte address 0x4 - core index']
  #allocation1 [shape = 'u32[144,128]{1,0:T(1,128)}', space=vmem, size = 0x12000, scoped, tag = 'internal scratch']
  %s0 = inlined_call_operand.hbm [shape: bf16[5,512], index: 0, kind: input, shape index: {}]
  %s1 = inlined_call_operand.vmem [shape: bf16[12,5], index: 1, kind: input, shape index: {}]
  %s2 = inlined_call_operand.vmem [shape: bf16[5,8,40], index: 2, kind: input, shape index: {}]
  %s3 = inlined_call_operand.vmem [shape: f32[8,1], index: 3, kind: input, shape index: {}]
  %s4 = inlined_call_operand.hbm [shape: f32[25,1,256], index: 4, kind: input, shape index: {}]
  %s5 = inlined_call_operand.hbm [shape: f32[16,512], index: 5, kind: output, shape index: {}]
  %s6 = sld [smem:[#allocation0]]
  $region61: #{tpu_custom_call.1} parent=0
    _
  %s8 = ssub.s32 1, %s6
  %s9 = scalar_select 0, %s8, %s6
  $region1: #{tpu_custom_call.1} parent=0
    #allocation2 [shape = 'u8[8192]{0}', space=vmem, size = 0x2000, scoped, tag = 'input window, operand 0']
    #allocation3 [shape = 's32[2]{0}', space=sflag, size = 0x8, scoped, tag = 'scoped memory for tpu_custom_call.1']
    #allocation4 [shape = 's32[2]{0}', space=sflag, size = 0x8, scoped, tag = 'scoped memory for tpu_custom_call.1']
    #allocation5 [shape = 'u8[25600]{0}', space=vmem, size = 0x6400, scoped, tag = 'input window, operand 4, single buffered']
    #allocation6 [shape = 's32[1]{0}', space=sflag, size = 0x4, scoped, tag = 'scoped memory for tpu_custom_call.1']
    #allocation7 [shape = 'u8[32768]{0}', space=vmem, size = 0x8000, scoped, tag = 'output window, operand 0']
    %10 = vsyncpa [#allocation3], 0
    %s11 = scalar_lea.sflag [#allocation3], 1
    %12 = vsyncpa %s11, 0
    %13 = vsyncpa [#allocation6], 0
    %14 = vsyncpa [#allocation4], 0
    %s15 = scalar_lea.sflag [#allocation4], 1
    %16 = vsyncpa %s15, 0
    loop: start=0, step=1, limit=4
    $region2: #{tpu_custom_call.1} parent=1 // loop_pre_header
      _
    $region3: #{tpu_custom_call.1} parent=1 // loop_header
      %s18 = sphi 0, %s22
      %p19 = scmp.ge.s32.totalorder %s18, 4
      %s28 = sphi 0, %s30
      %s31 = sphi 0, %s28
      %s32 = sphi 0, %s31
      %s48 = sphi 0, %s32
      %s52 = sphi 0, %s52
      %s54 = sphi 0, %s52
      %s55 = sphi 0, %s54
      %s69 = sphi 0, %s55
      %s73 = sphi 0, %s73
      %s75 = sphi 0, %s73
      %s76 = sphi 0, %s75
      %s90 = sphi 0, %s76
      %s94 = sphi 0, %s94
      %s96 = sphi 0, %s94
      %s97 = sphi 0, %s96
      %s111 = sphi 0, %s97
      %s115 = sphi 0, %s115
      %s117 = sphi 0, %s115
      %s118 = sphi 0, %s117
      %s132 = sphi 0, %s118
      %s138 = sphi 0, %s140
      %s141 = sphi 0, %s138
      %s142 = sphi 0, %s141
      %s158 = sphi 0, %s142
    $region4: #{tpu_custom_call.1} parent=1 // loop_header_branch
      %21 = sbr.rel (%p19) target = $region8
    $region5: #{tpu_custom_call.1} parent=1 // loop_body
      %s23 = ssub.s32 %s18, 1
      %s24 = ssub.s32 %s18, 2
      %s25 = sadd.s32 %s18, 1
      %s26 = ssub.s32 %s18, %s25
      %p27 = scmp.eq.s32.totalorder %s26, 0
      %s29 = sadd.s32 %s28, 1
      %s30 = scalar_select %p27, %s28, %s29
      %p33 = pneg %p27
      %p34 = scmp.eq.s32.totalorder %s18, 1
      %p35 = por %p33, %p34
      %p36 = scmp.ne.s32.totalorder %s28, %s31
      %p37 = scmp.eq.s32.totalorder %s18, 0
      %p38 = por %p36, %p37
      %p39 = scmp.ne.s32.totalorder %s28, %s31
      %p40 = scmp.eq.s32.totalorder %s23, 1
      %p41 = por %p39, %p40
      %p42 = scmp.ne.s32.totalorder %s31, %s32
      %p43 = scmp.eq.s32.totalorder %s23, 0
      %p44 = por %p42, %p43
      %p45 = scmp.ne.s32.totalorder %s31, %s32
      %p46 = scmp.eq.s32.totalorder %s24, 1
      %p47 = por %p45, %p46
      %p49 = scmp.ne.s32.totalorder %s32, %s48
      %p50 = scmp.eq.s32.totalorder %s24, 0
      %p51 = por %p49, %p50
      %s53 = sadd.s32 %s52, 1
      %p56 = scmp.eq.s32.totalorder %s18, 1
      %p57 = scmp.ne.s32.totalorder %s52, %s54
      %p58 = scmp.eq.s32.totalorder %s18, 0
      %p59 = por %p57, %p58
      %p60 = scmp.ne.s32.totalorder %s52, %s54
      %p61 = scmp.eq.s32.totalorder %s23, 1
      %p62 = por %p60, %p61
      %p63 = scmp.ne.s32.totalorder %s54, %s55
      %p64 = scmp.eq.s32.totalorder %s23, 0
      %p65 = por %p63, %p64
      %p66 = scmp.ne.s32.totalorder %s54, %s55
      %p67 = scmp.eq.s32.totalorder %s24, 1
      %p68 = por %p66, %p67
      %p70 = scmp.ne.s32.totalorder %s55, %s69
      %p71 = scmp.eq.s32.totalorder %s24, 0
      %p72 = por %p70, %p71
      %s74 = sadd.s32 %s73, 1
      %p77 = scmp.eq.s32.totalorder %s18, 1
      %p78 = scmp.ne.s32.totalorder %s73, %s75
      %p79 = scmp.eq.s32.totalorder %s18, 0
      %p80 = por %p78, %p79
      %p81 = scmp.ne.s32.totalorder %s73, %s75
      %p82 = scmp.eq.s32.totalorder %s23, 1
      %p83 = por %p81, %p82
      %p84 = scmp.ne.s32.totalorder %s75, %s76
      %p85 = scmp.eq.s32.totalorder %s23, 0
      %p86 = por %p84, %p85
      %p87 = scmp.ne.s32.totalorder %s75, %s76
      %p88 = scmp.eq.s32.totalorder %s24, 1
      %p89 = por %p87, %p88
      %p91 = scmp.ne.s32.totalorder %s76, %s90
      %p92 = scmp.eq.s32.totalorder %s24, 0
      %p93 = por %p91, %p92
      %s95 = sadd.s32 %s94, 1
      %p98 = scmp.eq.s32.totalorder %s18, 1
      %p99 = scmp.ne.s32.totalorder %s94, %s96
      %p100 = scmp.eq.s32.totalorder %s18, 0
      %p101 = por %p99, %p100
      %p102 = scmp.ne.s32.totalorder %s94, %s96
      %p103 = scmp.eq.s32.totalorder %s23, 1
      %p104 = por %p102, %p103
      %p105 = scmp.ne.s32.totalorder %s96, %s97
      %p106 = scmp.eq.s32.totalorder %s23, 0
      %p107 = por %p105, %p106
      %p108 = scmp.ne.s32.totalorder %s96, %s97
      %p109 = scmp.eq.s32.totalorder %s24, 1
      %p110 = por %p108, %p109
      %p112 = scmp.ne.s32.totalorder %s97, %s111
      %p113 = scmp.eq.s32.totalorder %s24, 0
      %p114 = por %p112, %p113
      %s116 = sadd.s32 %s115, 1
      %p119 = scmp.eq.s32.totalorder %s18, 1
      %p120 = scmp.ne.s32.totalorder %s115, %s117
      %p121 = scmp.eq.s32.totalorder %s18, 0
      %p122 = por %p120, %p121
      %p123 = scmp.ne.s32.totalorder %s115, %s117
      %p124 = scmp.eq.s32.totalorder %s23, 1
      %p125 = por %p123, %p124
      %p126 = scmp.ne.s32.totalorder %s117, %s118
      %p127 = scmp.eq.s32.totalorder %s23, 0
      %p128 = por %p126, %p127
      %p129 = scmp.ne.s32.totalorder %s117, %s118
      %p130 = scmp.eq.s32.totalorder %s24, 1
      %p131 = por %p129, %p130
      %p133 = scmp.ne.s32.totalorder %s118, %s132
      %p134 = scmp.eq.s32.totalorder %s24, 0
      %p135 = por %p133, %p134
      %s136 = ssub.s32 %s18, %s25
      %p137 = scmp.eq.s32.totalorder %s136, 0
      %s139 = sadd.s32 %s138, 1
      %s140 = scalar_select %p137, %s138, %s139
      %p143 = pneg %p137
      %p144 = scmp.eq.s32.totalorder %s18, 1
      %p145 = por %p143, %p144
      %p146 = scmp.ne.s32.totalorder %s138, %s141
      %p147 = scmp.eq.s32.totalorder %s18, 0
      %p148 = por %p146, %p147
      %p149 = scmp.ne.s32.totalorder %s138, %s141
      %p150 = scmp.eq.s32.totalorder %s23, 1
      %p151 = por %p149, %p150
      %p152 = scmp.ne.s32.totalorder %s141, %s142
      %p153 = scmp.eq.s32.totalorder %s23, 0
      %p154 = por %p152, %p153
      %p155 = scmp.ne.s32.totalorder %s141, %s142
      %p156 = scmp.eq.s32.totalorder %s24, 1
      %p157 = por %p155, %p156
      %p159 = scmp.ne.s32.totalorder %s142, %s158
      %p160 = scmp.eq.s32.totalorder %s24, 0
      %p161 = por %p159, %p160
      %p162 = scmp.le.s32.totalorder 1, %s18
      %p163 = scmp.lt.s32.totalorder %s18, 3
      %p164 = pnand %p162, %p163
      %p165 = pneg %p164
      // Predicated region
      $region9: #{tpu_custom_call.1} parent=5 // pred_check
        _
      $region10: #{tpu_custom_call.1} parent=5 // pred_check_branch
        %167 = sbr.rel (%p164) target = $region12
      $region11: #{tpu_custom_call.1} parent=5 // pred_region
        %s168 = ssub.s32 %s18, 1
        // Predicated region
        $region13: #{tpu_custom_call.1} parent=11 // pred_check
          %p169 = pneg %p65
        $region14: #{tpu_custom_call.1} parent=11 // pred_check_branch
          %171 = sbr.rel (%p169) target = $region16
        $region15: #{tpu_custom_call.1} parent=11 // pred_region
          _
        $region16: #{tpu_custom_call.1} parent=11 // pred_fallthru
          _
        // Predicated region
        $region17: #{tpu_custom_call.1} parent=11 // pred_check
          %p172 = pneg %p86
        $region18: #{tpu_custom_call.1} parent=11 // pred_check_branch
          %174 = sbr.rel (%p172) target = $region20
        $region19: #{tpu_custom_call.1} parent=11 // pred_region
          _
        $region20: #{tpu_custom_call.1} parent=11 // pred_fallthru
          _
        // Predicated region
        $region21: #{tpu_custom_call.1} parent=11 // pred_check
          %p175 = pneg %p107
        $region22: #{tpu_custom_call.1} parent=11 // pred_check_branch
          %177 = sbr.rel (%p175) target = $region24
        $region23: #{tpu_custom_call.1} parent=11 // pred_region
          _
        $region24: #{tpu_custom_call.1} parent=11 // pred_fallthru
          _
        // Predicated region
        $region25: #{tpu_custom_call.1} parent=11 // pred_check
          %p178 = pneg %p128
        $region26: #{tpu_custom_call.1} parent=11 // pred_check_branch
          %180 = sbr.rel (%p178) target = $region28
        $region27: #{tpu_custom_call.1} parent=11 // pred_region
          %s182 = ssub.s32 800, 800
          %183 = vsyncadd [#allocation6], %s182
          %s184 = sshll.u32 [#allocation5], 4
          %s185 = int_to_ptr.vmem [resolvable:$true] %s184
          %190 = dma.hbm_to_vmem [thread:$0]  %s4, 800, %s185, [#allocation6], 32, 32, 2
        $region28: #{tpu_custom_call.1} parent=11 // pred_fallthru
          _
      $region12: #{tpu_custom_call.1} parent=5 // pred_fallthru
        _
      %p191 = scmp.lt.s32.totalorder %s18, 2
      // Predicated region
      $region29: #{tpu_custom_call.1} parent=5 // pred_check
        %p192 = pneg %p191
      $region30: #{tpu_custom_call.1} parent=5 // pred_check_branch
        %194 = sbr.rel (%p192) target = $region32
      $region31: #{tpu_custom_call.1} parent=5 // pred_region
        // Predicated region
        $region33: #{tpu_custom_call.1} parent=31 // pred_check
          %p195 = pneg %p38
        $region34: #{tpu_custom_call.1} parent=31 // pred_check_branch
          %197 = sbr.rel (%p195) target = $region36
        $region35: #{tpu_custom_call.1} parent=31 // pred_region
          %s198 = sand.u32 %s28, 1
          %s199 = scalar_lea.sflag [#allocation3], %s198
          %s200 = sand.u32 %s28, 1
          %s201 = smul.addr %s200, 8
          %s202 = scalar_lea.vmem [#allocation2], %s201
          %s203 = smul.u32 2, %s18
          %s205 = ssub.s32 128, 128
          %206 = vsyncadd %s199, %s205
          %s207 = smul.addr %s203, 64
          %s208 = scalar_lea.hbm %s0, %s207
          %s210 = sshll.u32 %s202, 4
          %s211 = int_to_ptr.vmem [resolvable:$true] %s210
          %213 = dma.hbm_to_vmem [thread:$0]  %s208, 128, %s211, %s199
        $region36: #{tpu_custom_call.1} parent=31 // pred_fallthru
          _
      $region32: #{tpu_custom_call.1} parent=5 // pred_fallthru
        _
      %p214 = scmp.le.s32.totalorder 1, %s18
      %p215 = scmp.lt.s32.totalorder %s18, 3
      %p216 = pnand %p214, %p215
      %p217 = pneg %p216
      // Predicated region
      $region37: #{tpu_custom_call.1} parent=5 // pred_check
        _
      $region38: #{tpu_custom_call.1} parent=5 // pred_check_branch
        %219 = sbr.rel (%p216) target = $region40
      $region39: #{tpu_custom_call.1} parent=5 // pred_region
        %s220 = ssub.s32 %s18, 1
        %s221 = sand.u32 %s31, 1
        %s222 = scalar_lea.sflag [#allocation3], %s221
        %s223 = sand.u32 %s31, 1
        %s224 = smul.addr %s223, 8
        %s225 = scalar_lea.vmem [#allocation2], %s224
        // Predicated region
        $region41: #{tpu_custom_call.1} parent=39 // pred_check
          %p226 = pneg %p44
        $region42: #{tpu_custom_call.1} parent=39 // pred_check_branch
          %228 = sbr.rel (%p226) target = $region44
        $region43: #{tpu_custom_call.1} parent=39 // pred_region
          %229 = dma.done %s222, 128
        $region44: #{tpu_custom_call.1} parent=39 // pred_fallthru
          _
        // Predicated region
        $region45: #{tpu_custom_call.1} parent=39 // pred_check
          %p230 = pneg %p128
        $region46: #{tpu_custom_call.1} parent=39 // pred_check_branch
          %232 = sbr.rel (%p230) target = $region48
        $region47: #{tpu_custom_call.1} parent=39 // pred_region
          %233 = dma.done [#allocation6], 800
        $region48: #{tpu_custom_call.1} parent=39 // pred_fallthru
          _
        %s234 = sand.u32 %s31, 1
        %s235 = scalar_lea.sflag [#allocation3], %s234
        %s236 = sand.u32 %s31, 1
        %s237 = smul.addr %s236, 8
        %s238 = scalar_lea.vmem [#allocation2], %s237
        %p239 = pneg %p44
        %p240 = pneg %p41
        %p241 = pneg %p65
        %p242 = pneg %p62
        %p243 = pneg %p86
        %p244 = pneg %p83
        %p245 = pneg %p107
        %p246 = pneg %p104
        %p247 = pneg %p128
        %p248 = pneg %p125
        %p249 = pneg %p154
        %p250 = pneg %p151
        %s251 = sand.u32 %s141, 1
        %s252 = scalar_lea.sflag [#allocation4], %s251
        %s253 = sand.u32 %s141, 1
        %s254 = smul.addr %s253, 32
        %s255 = scalar_lea.vmem [#allocation7], %s254
        %s256 = smul.u32 2, %s23
        %s257 = smul.u32 2, %s23
        %v259 = vld [vmem:[%s1] sm:$0xf]
        %v260 = vld [vmem:[%s1 + $0x4] sm:$0x3]
        %v261 = vld [vmem:[%s225] sm:$0x77]
        %v264 = vunpack.c.l.b16 %v259
        %v265 = vunpack.c.l.b16 %v260
        %v266 = vpack.c.b16 %v265, %v264
        %v268 = vunpack.c.l.b16 %v261
        %v269 = vunpack.c.h.b16 %v261
        %v270 = vpack.c.b16 %v268, %v268
        %v271 = vpack.c.b16 %v269, %v269
        %vm272 = vcmask 39936
        %v274 = vsel %vm272, %v266, 0
        %vm276 = vcmask 1041408
        %vm277 = vcmask 1042432
        %v278 = vsel %vm276, 4294967295, 65535
        %v279 = vsel %vm277, %v278, 0
        %v281 = vand.u32 %v270, %v279
        %v284 = vand.u32 %v271, %v279
        %286 = vmatprep.subr.bf16.mxu0 %v284
        %287 = vmatpush1.bf16.msra.mxu0 %v281
        %288 = vmatprep.subr.bf16.mxu0 0
        %289 = vmatpush1.bf16.msra.mxu0 0
        %290 = vmatprep.subr.bf16.mxu0 0
        %291 = vmatpush1.bf16.msra.mxu0 0
        %292 = vmatprep.subr.bf16.mxu0 0
        %293 = vmatpush1.bf16.msra.mxu0 0
        %294 = vmatprep.subr.bf16.mxu0 0
        %295 = vmatpush1.bf16.msra.mxu0 0
        %296 = vmatprep.subr.bf16.mxu0 0
        %297 = vmatpush1.bf16.msra.mxu0 0
        %298 = vmatprep.subr.bf16.mxu0 0
        %299 = vmatpush1.bf16.msra.mxu0 0
        %300 = vmatprep.subr.bf16.mxu0 0
        %301 = vmatpush1.bf16.msra.mxu0 0
        %302 = vmatprep.subr.bf16.mxu0 0
        %303 = vmatpush1.bf16.msra.mxu0 0
        %304 = vmatprep.subr.bf16.mxu0 0
        %305 = vmatpush1.bf16.msra.mxu0 0
        %306 = vmatprep.subr.bf16.mxu0 0
        %307 = vmatpush1.bf16.msra.mxu0 0
        %308 = vmatprep.subr.bf16.mxu0 0
        %309 = vmatpush1.bf16.msra.mxu0 0
        %310 = vmatprep.subr.bf16.mxu0 0
        %311 = vmatpush1.bf16.msra.mxu0 0
        %312 = vmatprep.subr.bf16.mxu0 0
        %313 = vmatpush1.bf16.msra.mxu0 0
        %314 = vmatprep.subr.bf16.mxu0 0
        %315 = vmatpush1.bf16.msra.mxu0 0
        %316 = vmatprep.subr.bf16.mxu0 0
        %317 = vmatpush1.bf16.msra.mxu0 0
        %318 = vmatprep.mubr.bf16.mxu0 0
        %319 = vmatmul.mubr.bf16.gmra.mrb[0].mxu0 %v274
        %v320 = vpop.f32.mrb[0].mxu0
        %v321 = vadd.f32 0.0, %v320
        %v322 = vpop.f32.mrb[0].mxu0
        %v323 = vadd.f32 0.0, %v322
        %v324 = vpop.f32.mrb[0].mxu0
        %v325 = vadd.f32 0.0, %v324
        %v326 = vpop.f32.mrb[0].mxu0
        %v327 = vadd.f32 0.0, %v326
        %328 = vdwg.mxu0
        %vm329 = vcmp.gt.f32.partialorder %v321, 0.0
        %vm330 = vcmp.gt.f32.partialorder %v323, 0.0
        %vm331 = vcmp.gt.f32.partialorder %v325, 0.0
        %vm332 = vcmp.gt.f32.partialorder %v327, 0.0
        %v333 = vmul.f32 %v321, 0.01
        %v334 = vmul.f32 %v323, 0.01
        %v335 = vmul.f32 %v325, 0.01
        %v336 = vmul.f32 %v327, 0.01
        %v337 = vsel %vm329, %v321, %v333
        %v338 = vsel %vm330, %v323, %v334
        %v339 = vsel %vm331, %v325, %v335
        %v340 = vsel %vm332, %v327, %v336
        %341 = vrot.lane.b32.xlu0 %v337, 34
        %v342 = vpop.permute.xlu0 %341
        %343 = vrot.lane.b32.xlu0 %v338, 34
        %v344 = vpop.permute.xlu0 %343
        %v345 = vlaneseq
        %v346 = vand.u32 %v345, 127
        %vm347 = vcmp.lt.s32.totalorder %v346, 34
        %v348 = vsel %vm347, %v342, %v344
        %v349 = vsel %vm347, %v344, %v342
        %v350 = vld [vmem:[#allocation5] sm:$0x3]
        %v352 = vlaneseq
        %v353 = vshrl.u32 %v352, 7
        %v354 = vsub.s32 0, %v353
        %v355 = vrot.slane %v350, %v354
        %v356 = vlaneseq
        %v357 = vshrl.u32 %v356, 7
        %v358 = vsub.s32 1, %v357
        %v359 = vrot.slane %v350, %v358
        %v362 = vmul.f32 %v349, %v355
        %v363 = vmul.f32 %v348, %v359
        %364 = vrot.lane.b32.xlu0 %v337, 33
        %v365 = vpop.permute.xlu0 %364
        %366 = vrot.lane.b32.xlu0 %v338, 33
        %v367 = vpop.permute.xlu0 %366
        %vm368 = vcmp.lt.s32.totalorder %v346, 33
        %v369 = vsel %vm368, %v365, %v367
        %v370 = vsel %vm368, %v367, %v365
        %s371 = scalar_lea.vmem [#allocation5], 2
        %v372 = vld [vmem:[%s371] sm:$0x3]
        %v374 = vlaneseq
        %v375 = vshrl.u32 %v374, 7
        %v376 = vsub.s32 0, %v375
        %v377 = vrot.slane %v372, %v376
        %v378 = vlaneseq
        %v379 = vshrl.u32 %v378, 7
        %v380 = vsub.s32 1, %v379
        %v381 = vrot.slane %v372, %v380
        %v384 = vmul.f32 %v370, %v377
        %v385 = vmul.f32 %v369, %v381
        %386 = vrot.lane.b32.xlu0 %v337, 32
        %v387 = vpop.permute.xlu0 %386
        %388 = vrot.lane.b32.xlu0 %v338, 32
        %v389 = vpop.permute.xlu0 %388
        %vm390 = vcmp.lt.s32.totalorder %v346, 32
        %v391 = vsel %vm390, %v387, %v389
        %v392 = vsel %vm390, %v389, %v387
        %s393 = scalar_lea.vmem [#allocation5], 4
        %v394 = vld [vmem:[%s393] sm:$0x3]
        %v396 = vlaneseq
        %v397 = vshrl.u32 %v396, 7
        %v398 = vsub.s32 0, %v397
        %v399 = vrot.slane %v394, %v398
        %v400 = vlaneseq
        %v401 = vshrl.u32 %v400, 7
        %v402 = vsub.s32 1, %v401
        %v403 = vrot.slane %v394, %v402
        %v406 = vmul.f32 %v392, %v399
        %v407 = vmul.f32 %v391, %v403
        %408 = vrot.lane.b32.xlu0 %v337, 31
        %v409 = vpop.permute.xlu0 %408
        %410 = vrot.lane.b32.xlu0 %v338, 31
        %v411 = vpop.permute.xlu0 %410
        %vm412 = vcmp.lt.s32.totalorder %v346, 31
        %v413 = vsel %vm412, %v409, %v411
        %v414 = vsel %vm412, %v411, %v409
        %s415 = scalar_lea.vmem [#allocation5], 6
        %v416 = vld [vmem:[%s415] sm:$0x3]
        %v418 = vlaneseq
        %v419 = vshrl.u32 %v418, 7
        %v420 = vsub.s32 0, %v419
        %v421 = vrot.slane %v416, %v420
        %v422 = vlaneseq
        %v423 = vshrl.u32 %v422, 7
        %v424 = vsub.s32 1, %v423
        %v425 = vrot.slane %v416, %v424
        %v428 = vmul.f32 %v414, %v421
        %v429 = vmul.f32 %v413, %v425
        %430 = vrot.lane.b32.xlu0 %v337, 30
        %v431 = vpop.permute.xlu0 %430
        %432 = vrot.lane.b32.xlu0 %v338, 30
        %v433 = vpop.permute.xlu0 %432
        %vm434 = vcmp.lt.s32.totalorder %v346, 30
        %v435 = vsel %vm434, %v431, %v433
        %v436 = vsel %vm434, %v433, %v431
        %s437 = scalar_lea.vmem [#allocation5], 8
        %v438 = vld [vmem:[%s437] sm:$0x3]
        %v440 = vlaneseq
        %v441 = vshrl.u32 %v440, 7
        %v442 = vsub.s32 0, %v441
        %v443 = vrot.slane %v438, %v442
        %v444 = vlaneseq
        %v445 = vshrl.u32 %v444, 7
        %v446 = vsub.s32 1, %v445
        %v447 = vrot.slane %v438, %v446
        %v450 = vmul.f32 %v436, %v443
        %v451 = vmul.f32 %v435, %v447
        %v452 = vpack.c.bf16 %v384, %v362
        %v453 = vpack.c.bf16 %v385, %v363
        %v454 = vpack.c.bf16 %v428, %v406
        %v455 = vpack.c.bf16 %v429, %v407
        %v456 = vpack.c.bf16 %v450, %v450
        %v457 = vpack.c.bf16 %v451, %v451
        %v458 = vld [vmem:[%s2] sm:$0xf]
        %459 = vrot.lane.b32.xlu0 %v337, 18
        %v460 = vpop.permute.xlu0 %459
        %461 = vrot.lane.b32.xlu0 %v338, 18
        %v462 = vpop.permute.xlu0 %461
        %vm463 = vcmp.lt.s32.totalorder %v346, 18
        %v464 = vsel %vm463, %v460, %v462
        %v465 = vsel %vm463, %v462, %v460
        %s466 = scalar_lea.vmem [#allocation5], 10
        %v467 = vld [vmem:[%s466] sm:$0x3]
        %v469 = vlaneseq
        %v470 = vshrl.u32 %v469, 7
        %v471 = vsub.s32 0, %v470
        %v472 = vrot.slane %v467, %v471
        %v473 = vlaneseq
        %v474 = vshrl.u32 %v473, 7
        %v475 = vsub.s32 1, %v474
        %v476 = vrot.slane %v467, %v475
        %v479 = vmul.f32 %v465, %v472
        %v480 = vmul.f32 %v464, %v476
        %481 = vrot.lane.b32.xlu0 %v337, 17
        %v482 = vpop.permute.xlu0 %481
        %483 = vrot.lane.b32.xlu0 %v338, 17
        %v484 = vpop.permute.xlu0 %483
        %vm485 = vcmp.lt.s32.totalorder %v346, 17
        %v486 = vsel %vm485, %v482, %v484
        %v487 = vsel %vm485, %v484, %v482
        %s488 = scalar_lea.vmem [#allocation5], 12
        %v489 = vld [vmem:[%s488] sm:$0x3]
        %v491 = vlaneseq
        %v492 = vshrl.u32 %v491, 7
        %v493 = vsub.s32 0, %v492
        %v494 = vrot.slane %v489, %v493
        %v495 = vlaneseq
        %v496 = vshrl.u32 %v495, 7
        %v497 = vsub.s32 1, %v496
        %v498 = vrot.slane %v489, %v497
        %v501 = vmul.f32 %v487, %v494
        %v502 = vmul.f32 %v486, %v498
        %503 = vrot.lane.b32.xlu0 %v337, 16
        %v504 = vpop.permute.xlu0 %503
        %505 = vrot.lane.b32.xlu0 %v338, 16
        %v506 = vpop.permute.xlu0 %505
        %vm507 = vcmp.lt.s32.totalorder %v346, 16
        %v508 = vsel %vm507, %v504, %v506
        %v509 = vsel %vm507, %v506, %v504
        %s510 = scalar_lea.vmem [#allocation5], 14
        %v511 = vld [vmem:[%s510] sm:$0x3]
        %v513 = vlaneseq
        %v514 = vshrl.u32 %v513, 7
        %v515 = vsub.s32 0, %v514
        %v516 = vrot.slane %v511, %v515
        %v517 = vlaneseq
        %v518 = vshrl.u32 %v517, 7
        %v519 = vsub.s32 1, %v518
        %v520 = vrot.slane %v511, %v519
        %v523 = vmul.f32 %v509, %v516
        %v524 = vmul.f32 %v508, %v520
        %525 = vrot.lane.b32.xlu0 %v337, 15
        %v526 = vpop.permute.xlu0 %525
        %527 = vrot.lane.b32.xlu0 %v338, 15
        %v528 = vpop.permute.xlu0 %527
        %vm529 = vcmp.lt.s32.totalorder %v346, 15
        %v530 = vsel %vm529, %v526, %v528
        %v531 = vsel %vm529, %v528, %v526
        %s532 = scalar_lea.vmem [#allocation5], 16
        %v533 = vld [vmem:[%s532] sm:$0x3]
        %v535 = vlaneseq
        %v536 = vshrl.u32 %v535, 7
        %v537 = vsub.s32 0, %v536
        %v538 = vrot.slane %v533, %v537
        %v539 = vlaneseq
        %v540 = vshrl.u32 %v539, 7
        %v541 = vsub.s32 1, %v540
        %v542 = vrot.slane %v533, %v541
        %v545 = vmul.f32 %v531, %v538
        %v546 = vmul.f32 %v530, %v542
        %547 = vrot.lane.b32.xlu0 %v337, 14
        %v548 = vpop.permute.xlu0 %547
        %549 = vrot.lane.b32.xlu0 %v338, 14
        %v550 = vpop.permute.xlu0 %549
        %vm551 = vcmp.lt.s32.totalorder %v346, 14
        %v552 = vsel %vm551, %v548, %v550
        %v553 = vsel %vm551, %v550, %v548
        %s554 = scalar_lea.vmem [#allocation5], 18
        %v555 = vld [vmem:[%s554] sm:$0x3]
        %v557 = vlaneseq
        %v558 = vshrl.u32 %v557, 7
        %v559 = vsub.s32 0, %v558
        %v560 = vrot.slane %v555, %v559
        %v561 = vlaneseq
        %v562 = vshrl.u32 %v561, 7
        %v563 = vsub.s32 1, %v562
        %v564 = vrot.slane %v555, %v563
        %v567 = vmul.f32 %v553, %v560
        %v568 = vmul.f32 %v552, %v564
        %v569 = vpack.c.bf16 %v501, %v479
        %v570 = vpack.c.bf16 %v502, %v480
        %v571 = vpack.c.bf16 %v545, %v523
        %v572 = vpack.c.bf16 %v546, %v524
        %v573 = vpack.c.bf16 %v567, %v567
        %v574 = vpack.c.bf16 %v568, %v568
        %s575 = scalar_lea.vmem %s2, 4
        %v576 = vld [vmem:[%s575] sm:$0xf]
        %vm577 = vcmask 326656
        %v579 = vsel %vm577, %v576, 0
        %vm581 = vcmask 1043456
        %v583 = vsel %vm581, %v573, 0
        %v586 = vsel %vm581, %v574, 0
        %588 = vmatprep.subr.bf16.mxu0 %v570
        %589 = vmatpush1.bf16.msra.mxu0 %v569
        %590 = vmatprep.subr.bf16.mxu0 %v572
        %591 = vmatpush1.bf16.msra.mxu0 %v571
        %592 = vmatprep.subr.bf16.mxu0 %v586
        %593 = vmatpush1.bf16.msra.mxu0 %v583
        %594 = vmatprep.subr.bf16.mxu0 0
        %595 = vmatpush1.bf16.msra.mxu0 0
        %596 = vmatprep.subr.bf16.mxu0 0
        %597 = vmatpush1.bf16.msra.mxu0 0
        %598 = vmatprep.subr.bf16.mxu0 0
        %599 = vmatpush1.bf16.msra.mxu0 0
        %600 = vmatprep.subr.bf16.mxu0 0
        %601 = vmatpush1.bf16.msra.mxu0 0
        %602 = vmatprep.subr.bf16.mxu0 0
        %603 = vmatpush1.bf16.msra.mxu0 0
        %604 = vmatprep.subr.bf16.mxu0 0
        %605 = vmatpush1.bf16.msra.mxu0 0
        %606 = vmatprep.subr.bf16.mxu0 0
        %607 = vmatpush1.bf16.msra.mxu0 0
        %608 = vmatprep.subr.bf16.mxu0 0
        %609 = vmatpush1.bf16.msra.mxu0 0
        %610 = vmatprep.subr.bf16.mxu0 0
        %611 = vmatpush1.bf16.msra.mxu0 0
        %612 = vmatprep.subr.bf16.mxu0 0
        %613 = vmatpush1.bf16.msra.mxu0 0
        %614 = vmatprep.subr.bf16.mxu0 0
        %615 = vmatpush1.bf16.msra.mxu0 0
        %616 = vmatprep.subr.bf16.mxu0 0
        %617 = vmatpush1.bf16.msra.mxu0 0
        %618 = vmatprep.subr.bf16.mxu0 0
        %619 = vmatpush1.bf16.msra.mxu0 0
        %620 = vmatprep.mubr.bf16.mxu0 0
        %621 = vmatmul.mubr.bf16.gmra.mrb[0].mxu0 %v579
        %v622 = vpop.f32.mrb[0].mxu0
        %v623 = vadd.f32 0.0, %v622
        %v624 = vpop.f32.mrb[0].mxu0
        %v625 = vadd.f32 0.0, %v624
        %v626 = vpop.f32.mrb[0].mxu0
        %v627 = vpop.f32.mrb[0].mxu0
        %628 = vdwg.mxu0
        %v630 = vsel %vm577, %v458, 0
        %v633 = vsel %vm581, %v456, 0
        %v636 = vsel %vm581, %v457, 0
        %638 = vmatprep.subr.bf16.mxu0 %v453
        %639 = vmatpush1.bf16.msra.mxu0 %v452
        %640 = vmatprep.subr.bf16.mxu0 %v455
        %641 = vmatpush1.bf16.msra.mxu0 %v454
        %642 = vmatprep.subr.bf16.mxu0 %v636
        %643 = vmatpush1.bf16.msra.mxu0 %v633
        %644 = vmatprep.subr.bf16.mxu0 0
        %645 = vmatpush1.bf16.msra.mxu0 0
        %646 = vmatprep.subr.bf16.mxu0 0
        %647 = vmatpush1.bf16.msra.mxu0 0
        %648 = vmatprep.subr.bf16.mxu0 0
        %649 = vmatpush1.bf16.msra.mxu0 0
        %650 = vmatprep.subr.bf16.mxu0 0
        %651 = vmatpush1.bf16.msra.mxu0 0
        %652 = vmatprep.subr.bf16.mxu0 0
        %653 = vmatpush1.bf16.msra.mxu0 0
        %654 = vmatprep.subr.bf16.mxu0 0
        %655 = vmatpush1.bf16.msra.mxu0 0
        %656 = vmatprep.subr.bf16.mxu0 0
        %657 = vmatpush1.bf16.msra.mxu0 0
        %658 = vmatprep.subr.bf16.mxu0 0
        %659 = vmatpush1.bf16.msra.mxu0 0
        %660 = vmatprep.subr.bf16.mxu0 0
        %661 = vmatpush1.bf16.msra.mxu0 0
        %662 = vmatprep.subr.bf16.mxu0 0
        %663 = vmatpush1.bf16.msra.mxu0 0
        %664 = vmatprep.subr.bf16.mxu0 0
        %665 = vmatpush1.bf16.msra.mxu0 0
        %666 = vmatprep.subr.bf16.mxu0 0
        %667 = vmatpush1.bf16.msra.mxu0 0
        %668 = vmatprep.subr.bf16.mxu0 0
        %669 = vmatpush1.bf16.msra.mxu0 0
        %670 = vmatprep.mubr.bf16.mxu0 0
        %671 = vmatmul.mubr.bf16.gmra.mrb[0].mxu0 %v630
        %v672 = vpop.f32.mrb[0].mxu0
        %v673 = vadd.f32 %v623, %v672
        %v674 = vpop.f32.mrb[0].mxu0
        %v675 = vadd.f32 %v625, %v674
        %v676 = vpop.f32.mrb[0].mxu0
        %v677 = vpop.f32.mrb[0].mxu0
        %678 = vdwg.mxu0
        %679 = vrot.lane.b32.xlu0 %v337, 2
        %v680 = vpop.permute.xlu0 %679
        %681 = vrot.lane.b32.xlu0 %v338, 2
        %v682 = vpop.permute.xlu0 %681
        %vm683 = vcmp.lt.s32.totalorder %v346, 2
        %v684 = vsel %vm683, %v680, %v682
        %v685 = vsel %vm683, %v682, %v680
        %s686 = scalar_lea.vmem [#allocation5], 20
        %v687 = vld [vmem:[%s686] sm:$0x3]
        %v689 = vlaneseq
        %v690 = vshrl.u32 %v689, 7
        %v691 = vsub.s32 0, %v690
        %v692 = vrot.slane %v687, %v691
        %v693 = vlaneseq
        %v694 = vshrl.u32 %v693, 7
        %v695 = vsub.s32 1, %v694
        %v696 = vrot.slane %v687, %v695
        %v699 = vmul.f32 %v685, %v692
        %v700 = vmul.f32 %v684, %v696
        %701 = vrot.lane.b32.xlu0 %v337, 1
        %v702 = vpop.permute.xlu0 %701
        %703 = vrot.lane.b32.xlu0 %v338, 1
        %v704 = vpop.permute.xlu0 %703
        %vm705 = vcmp.lt.s32.totalorder %v346, 1
        %v706 = vsel %vm705, %v702, %v704
        %v707 = vsel %vm705, %v704, %v702
        %s708 = scalar_lea.vmem [#allocation5], 22
        %v709 = vld [vmem:[%s708] sm:$0x3]
        %v711 = vlaneseq
        %v712 = vshrl.u32 %v711, 7
        %v713 = vsub.s32 0, %v712
        %v714 = vrot.slane %v709, %v713
        %v715 = vlaneseq
        %v716 = vshrl.u32 %v715, 7
        %v717 = vsub.s32 1, %v716
        %v718 = vrot.slane %v709, %v717
        %v721 = vmul.f32 %v707, %v714
        %v722 = vmul.f32 %v706, %v718
        %723 = vrot.lane.b32.xlu0 %v337, 127
        %v724 = vpop.permute.xlu0 %723
        %725 = vrot.lane.b32.xlu0 %v338, 127
        %v726 = vpop.permute.xlu0 %725
        %vm727 = vcmp.lt.s32.totalorder %v346, 127
        %v728 = vsel %vm727, %v724, %v726
        %v729 = vsel %vm727, %v726, %v724
        %s730 = scalar_lea.vmem [#allocation5], 26
        %v731 = vld [vmem:[%s730] sm:$0x3]
        %v733 = vlaneseq
        %v734 = vshrl.u32 %v733, 7
        %v735 = vsub.s32 0, %v734
        %v736 = vrot.slane %v731, %v735
        %v737 = vlaneseq
        %v738 = vshrl.u32 %v737, 7
        %v739 = vsub.s32 1, %v738
        %v740 = vrot.slane %v731, %v739
        %v743 = vmul.f32 %v728, %v736
        %v744 = vmul.f32 %v729, %v740
        %745 = vrot.lane.b32.xlu0 %v337, 126
        %v746 = vpop.permute.xlu0 %745
        %747 = vrot.lane.b32.xlu0 %v338, 126
        %v748 = vpop.permute.xlu0 %747
        %vm749 = vcmp.lt.s32.totalorder %v346, 126
        %v750 = vsel %vm749, %v746, %v748
        %v751 = vsel %vm749, %v748, %v746
        %s752 = scalar_lea.vmem [#allocation5], 28
        %v753 = vld [vmem:[%s752] sm:$0x3]
        %v755 = vlaneseq
        %v756 = vshrl.u32 %v755, 7
        %v757 = vsub.s32 0, %v756
        %v758 = vrot.slane %v753, %v757
        %v759 = vlaneseq
        %v760 = vshrl.u32 %v759, 7
        %v761 = vsub.s32 1, %v760
        %v762 = vrot.slane %v753, %v761
        %v765 = vmul.f32 %v750, %v758
        %v766 = vmul.f32 %v751, %v762
        %v767 = vpack.c.bf16 %v721, %v699
        %v768 = vpack.c.bf16 %v722, %v700
        %v769 = vpack.c.bf16 %v743, %v337
        %v770 = vpack.c.bf16 %v744, %v338
        %v771 = vpack.c.bf16 %v765, %v765
        %v772 = vpack.c.bf16 %v766, %v766
        %s773 = scalar_lea.vmem %s2, 8
        %v774 = vld [vmem:[%s773] sm:$0xf]
        %v776 = vsel %vm577, %v774, 0
        %v779 = vsel %vm581, %v771, 0
        %v782 = vsel %vm581, %v772, 0
        %784 = vmatprep.subr.bf16.mxu0 %v768
        %785 = vmatpush1.bf16.msra.mxu0 %v767
        %786 = vmatprep.subr.bf16.mxu0 %v770
        %787 = vmatpush1.bf16.msra.mxu0 %v769
        %788 = vmatprep.subr.bf16.mxu0 %v782
        %789 = vmatpush1.bf16.msra.mxu0 %v779
        %790 = vmatprep.subr.bf16.mxu0 0
        %791 = vmatpush1.bf16.msra.mxu0 0
        %792 = vmatprep.subr.bf16.mxu0 0
        %793 = vmatpush1.bf16.msra.mxu0 0
        %794 = vmatprep.subr.bf16.mxu0 0
        %795 = vmatpush1.bf16.msra.mxu0 0
        %796 = vmatprep.subr.bf16.mxu0 0
        %797 = vmatpush1.bf16.msra.mxu0 0
        %798 = vmatprep.subr.bf16.mxu0 0
        %799 = vmatpush1.bf16.msra.mxu0 0
        %800 = vmatprep.subr.bf16.mxu0 0
        %801 = vmatpush1.bf16.msra.mxu0 0
        %802 = vmatprep.subr.bf16.mxu0 0
        %803 = vmatpush1.bf16.msra.mxu0 0
        %804 = vmatprep.subr.bf16.mxu0 0
        %805 = vmatpush1.bf16.msra.mxu0 0
        %806 = vmatprep.subr.bf16.mxu0 0
        %807 = vmatpush1.bf16.msra.mxu0 0
        %808 = vmatprep.subr.bf16.mxu0 0
        %809 = vmatpush1.bf16.msra.mxu0 0
        %810 = vmatprep.subr.bf16.mxu0 0
        %811 = vmatpush1.bf16.msra.mxu0 0
        %812 = vmatprep.subr.bf16.mxu0 0
        %813 = vmatpush1.bf16.msra.mxu0 0
        %814 = vmatprep.subr.bf16.mxu0 0
        %815 = vmatpush1.bf16.msra.mxu0 0
        %816 = vmatprep.mubr.bf16.mxu0 0
        %817 = vmatmul.mubr.bf16.gmra.mrb[0].mxu0 %v776
        %v818 = vpop.f32.mrb[0].mxu0
        %v819 = vadd.f32 0.0, %v818
        %v820 = vpop.f32.mrb[0].mxu0
        %v821 = vadd.f32 0.0, %v820
        %v822 = vpop.f32.mrb[0].mxu0
        %v823 = vpop.f32.mrb[0].mxu0
        %824 = vdwg.mxu0
        %v825 = vadd.f32 %v673, %v819
        %v826 = vadd.f32 %v675, %v821
        %827 = vrot.lane.b32.xlu0 %v337, 114
        %v828 = vpop.permute.xlu0 %827
        %829 = vrot.lane.b32.xlu0 %v338, 114
        %v830 = vpop.permute.xlu0 %829
        %vm831 = vcmp.lt.s32.totalorder %v346, 114
        %v832 = vsel %vm831, %v828, %v830
        %v833 = vsel %vm831, %v830, %v828
        %s834 = scalar_lea.vmem [#allocation5], 30
        %v835 = vld [vmem:[%s834] sm:$0x3]
        %v837 = vlaneseq
        %v838 = vshrl.u32 %v837, 7
        %v839 = vsub.s32 0, %v838
        %v840 = vrot.slane %v835, %v839
        %v841 = vlaneseq
        %v842 = vshrl.u32 %v841, 7
        %v843 = vsub.s32 1, %v842
        %v844 = vrot.slane %v835, %v843
        %v847 = vmul.f32 %v832, %v840
        %v848 = vmul.f32 %v833, %v844
        %849 = vrot.lane.b32.xlu0 %v337, 113
        %v850 = vpop.permute.xlu0 %849
        %851 = vrot.lane.b32.xlu0 %v338, 113
        %v852 = vpop.permute.xlu0 %851
        %vm853 = vcmp.lt.s32.totalorder %v346, 113
        %v854 = vsel %vm853, %v850, %v852
        %v855 = vsel %vm853, %v852, %v850
        %s856 = scalar_lea.vmem [#allocation5], 32
        %v857 = vld [vmem:[%s856] sm:$0x3]
        %v859 = vlaneseq
        %v860 = vshrl.u32 %v859, 7
        %v861 = vsub.s32 0, %v860
        %v862 = vrot.slane %v857, %v861
        %v863 = vlaneseq
        %v864 = vshrl.u32 %v863, 7
        %v865 = vsub.s32 1, %v864
        %v866 = vrot.slane %v857, %v865
        %v869 = vmul.f32 %v854, %v862
        %v870 = vmul.f32 %v855, %v866
        %871 = vrot.lane.b32.xlu0 %v337, 112
        %v872 = vpop.permute.xlu0 %871
        %873 = vrot.lane.b32.xlu0 %v338, 112
        %v874 = vpop.permute.xlu0 %873
        %vm875 = vcmp.lt.s32.totalorder %v346, 112
        %v876 = vsel %vm875, %v872, %v874
        %v877 = vsel %vm875, %v874, %v872
        %s878 = scalar_lea.vmem [#allocation5], 34
        %v879 = vld [vmem:[%s878] sm:$0x3]
        %v881 = vlaneseq
        %v882 = vshrl.u32 %v881, 7
        %v883 = vsub.s32 0, %v882
        %v884 = vrot.slane %v879, %v883
        %v885 = vlaneseq
        %v886 = vshrl.u32 %v885, 7
        %v887 = vsub.s32 1, %v886
        %v888 = vrot.slane %v879, %v887
        %v891 = vmul.f32 %v876, %v884
        %v892 = vmul.f32 %v877, %v888
        %893 = vrot.lane.b32.xlu0 %v337, 111
        %v894 = vpop.permute.xlu0 %893
        %895 = vrot.lane.b32.xlu0 %v338, 111
        %v896 = vpop.permute.xlu0 %895
        %vm897 = vcmp.lt.s32.totalorder %v346, 111
        %v898 = vsel %vm897, %v894, %v896
        %v899 = vsel %vm897, %v896, %v894
        %s900 = scalar_lea.vmem [#allocation5], 36
        %v901 = vld [vmem:[%s900] sm:$0x3]
        %v903 = vlaneseq
        %v904 = vshrl.u32 %v903, 7
        %v905 = vsub.s32 0, %v904
        %v906 = vrot.slane %v901, %v905
        %v907 = vlaneseq
        %v908 = vshrl.u32 %v907, 7
        %v909 = vsub.s32 1, %v908
        %v910 = vrot.slane %v901, %v909
        %v913 = vmul.f32 %v898, %v906
        %v914 = vmul.f32 %v899, %v910
        %915 = vrot.lane.b32.xlu0 %v337, 110
        %v916 = vpop.permute.xlu0 %915
        %917 = vrot.lane.b32.xlu0 %v338, 110
        %v918 = vpop.permute.xlu0 %917
        %vm919 = vcmp.lt.s32.totalorder %v346, 110
        %v920 = vsel %vm919, %v916, %v918
        %v921 = vsel %vm919, %v918, %v916
        %s922 = scalar_lea.vmem [#allocation5], 38
        %v923 = vld [vmem:[%s922] sm:$0x3]
        %v925 = vlaneseq
        %v926 = vshrl.u32 %v925, 7
        %v927 = vsub.s32 0, %v926
        %v928 = vrot.slane %v923, %v927
        %v929 = vlaneseq
        %v930 = vshrl.u32 %v929, 7
        %v931 = vsub.s32 1, %v930
        %v932 = vrot.slane %v923, %v931
        %v935 = vmul.f32 %v920, %v928
        %v936 = vmul.f32 %v921, %v932
        %v937 = vpack.c.bf16 %v869, %v847
        %v938 = vpack.c.bf16 %v870, %v848
        %v939 = vpack.c.bf16 %v913, %v891
        %v940 = vpack.c.bf16 %v914, %v892
        %v941 = vpack.c.bf16 %v935, %v935
        %v942 = vpack.c.bf16 %v936, %v936
        %s943 = scalar_lea.vmem %s2, 12
        %v944 = vld [vmem:[%s943] sm:$0xf]
        %v946 = vsel %vm577, %v944, 0
        %v949 = vsel %vm581, %v941, 0
        %v952 = vsel %vm581, %v942, 0
        %954 = vmatprep.subr.bf16.mxu0 %v938
        %955 = vmatpush1.bf16.msra.mxu0 %v937
        %956 = vmatprep.subr.bf16.mxu0 %v940
        %957 = vmatpush1.bf16.msra.mxu0 %v939
        %958 = vmatprep.subr.bf16.mxu0 %v952
        %959 = vmatpush1.bf16.msra.mxu0 %v949
        %960 = vmatprep.subr.bf16.mxu0 0
        %961 = vmatpush1.bf16.msra.mxu0 0
        %962 = vmatprep.subr.bf16.mxu0 0
        %963 = vmatpush1.bf16.msra.mxu0 0
        %964 = vmatprep.subr.bf16.mxu0 0
        %965 = vmatpush1.bf16.msra.mxu0 0
        %966 = vmatprep.subr.bf16.mxu0 0
        %967 = vmatpush1.bf16.msra.mxu0 0
        %968 = vmatprep.subr.bf16.mxu0 0
        %969 = vmatpush1.bf16.msra.mxu0 0
        %970 = vmatprep.subr.bf16.mxu0 0
        %971 = vmatpush1.bf16.msra.mxu0 0
        %972 = vmatprep.subr.bf16.mxu0 0
        %973 = vmatpush1.bf16.msra.mxu0 0
        %974 = vmatprep.subr.bf16.mxu0 0
        %975 = vmatpush1.bf16.msra.mxu0 0
        %976 = vmatprep.subr.bf16.mxu0 0
        %977 = vmatpush1.bf16.msra.mxu0 0
        %978 = vmatprep.subr.bf16.mxu0 0
        %979 = vmatpush1.bf16.msra.mxu0 0
        %980 = vmatprep.subr.bf16.mxu0 0
        %981 = vmatpush1.bf16.msra.mxu0 0
        %982 = vmatprep.subr.bf16.mxu0 0
        %983 = vmatpush1.bf16.msra.mxu0 0
        %984 = vmatprep.subr.bf16.mxu0 0
        %985 = vmatpush1.bf16.msra.mxu0 0
        %986 = vmatprep.mubr.bf16.mxu0 0
        %987 = vmatmul.mubr.bf16.gmra.mrb[0].mxu0 %v946
        %v988 = vpop.f32.mrb[0].mxu0
        %v989 = vadd.f32 0.0, %v988
        %v990 = vpop.f32.mrb[0].mxu0
        %v991 = vadd.f32 0.0, %v990
        %v992 = vpop.f32.mrb[0].mxu0
        %v993 = vpop.f32.mrb[0].mxu0
        %994 = vdwg.mxu0
        %v995 = vadd.f32 %v825, %v989
        %v996 = vadd.f32 %v826, %v991
        %997 = vrot.lane.b32.xlu0 %v337, 98
        %v998 = vpop.permute.xlu0 %997
        %999 = vrot.lane.b32.xlu0 %v338, 98
        %v1000 = vpop.permute.xlu0 %999
        %vm1001 = vcmp.lt.s32.totalorder %v346, 98
        %v1002 = vsel %vm1001, %v998, %v1000
        %v1003 = vsel %vm1001, %v1000, %v998
        %s1004 = scalar_lea.vmem [#allocation5], 40
        %v1005 = vld [vmem:[%s1004] sm:$0x3]
        %v1007 = vlaneseq
        %v1008 = vshrl.u32 %v1007, 7
        %v1009 = vsub.s32 0, %v1008
        %v1010 = vrot.slane %v1005, %v1009
        %v1011 = vlaneseq
        %v1012 = vshrl.u32 %v1011, 7
        %v1013 = vsub.s32 1, %v1012
        %v1014 = vrot.slane %v1005, %v1013
        %v1017 = vmul.f32 %v1002, %v1010
        %v1018 = vmul.f32 %v1003, %v1014
        %1019 = vrot.lane.b32.xlu0 %v337, 97
        %v1020 = vpop.permute.xlu0 %1019
        %1021 = vrot.lane.b32.xlu0 %v338, 97
        %v1022 = vpop.permute.xlu0 %1021
        %vm1023 = vcmp.lt.s32.totalorder %v346, 97
        %v1024 = vsel %vm1023, %v1020, %v1022
        %v1025 = vsel %vm1023, %v1022, %v1020
        %s1026 = scalar_lea.vmem [#allocation5], 42
        %v1027 = vld [vmem:[%s1026] sm:$0x3]
        %v1029 = vlaneseq
        %v1030 = vshrl.u32 %v1029, 7
        %v1031 = vsub.s32 0, %v1030
        %v1032 = vrot.slane %v1027, %v1031
        %v1033 = vlaneseq
        %v1034 = vshrl.u32 %v1033, 7
        %v1035 = vsub.s32 1, %v1034
        %v1036 = vrot.slane %v1027, %v1035
        %v1039 = vmul.f32 %v1024, %v1032
        %v1040 = vmul.f32 %v1025, %v1036
        %1041 = vrot.lane.b32.xlu0 %v337, 96
        %v1042 = vpop.permute.xlu0 %1041
        %1043 = vrot.lane.b32.xlu0 %v338, 96
        %v1044 = vpop.permute.xlu0 %1043
        %vm1045 = vcmp.lt.s32.totalorder %v346, 96
        %v1046 = vsel %vm1045, %v1042, %v1044
        %v1047 = vsel %vm1045, %v1044, %v1042
        %s1048 = scalar_lea.vmem [#allocation5], 44
        %v1049 = vld [vmem:[%s1048] sm:$0x3]
        %v1051 = vlaneseq
        %v1052 = vshrl.u32 %v1051, 7
        %v1053 = vsub.s32 0, %v1052
        %v1054 = vrot.slane %v1049, %v1053
        %v1055 = vlaneseq
        %v1056 = vshrl.u32 %v1055, 7
        %v1057 = vsub.s32 1, %v1056
        %v1058 = vrot.slane %v1049, %v1057
        %v1061 = vmul.f32 %v1046, %v1054
        %v1062 = vmul.f32 %v1047, %v1058
        %1063 = vrot.lane.b32.xlu0 %v337, 95
        %v1064 = vpop.permute.xlu0 %1063
        %1065 = vrot.lane.b32.xlu0 %v338, 95
        %v1066 = vpop.permute.xlu0 %1065
        %vm1067 = vcmp.lt.s32.totalorder %v346, 95
        %v1068 = vsel %vm1067, %v1064, %v1066
        %v1069 = vsel %vm1067, %v1066, %v1064
        %s1070 = scalar_lea.vmem [#allocation5], 46
        %v1071 = vld [vmem:[%s1070] sm:$0x3]
        %v1073 = vlaneseq
        %v1074 = vshrl.u32 %v1073, 7
        %v1075 = vsub.s32 0, %v1074
        %v1076 = vrot.slane %v1071, %v1075
        %v1077 = vlaneseq
        %v1078 = vshrl.u32 %v1077, 7
        %v1079 = vsub.s32 1, %v1078
        %v1080 = vrot.slane %v1071, %v1079
        %v1083 = vmul.f32 %v1068, %v1076
        %v1084 = vmul.f32 %v1069, %v1080
        %1085 = vrot.lane.b32.xlu0 %v337, 94
        %v1086 = vpop.permute.xlu0 %1085
        %1087 = vrot.lane.b32.xlu0 %v338, 94
        %v1088 = vpop.permute.xlu0 %1087
        %vm1089 = vcmp.lt.s32.totalorder %v346, 94
        %v1090 = vsel %vm1089, %v1086, %v1088
        %v1091 = vsel %vm1089, %v1088, %v1086
        %s1092 = scalar_lea.vmem [#allocation5], 48
        %v1093 = vld [vmem:[%s1092] sm:$0x3]
        %v1095 = vlaneseq
        %v1096 = vshrl.u32 %v1095, 7
        %v1097 = vsub.s32 0, %v1096
        %v1098 = vrot.slane %v1093, %v1097
        %v1099 = vlaneseq
        %v1100 = vshrl.u32 %v1099, 7
        %v1101 = vsub.s32 1, %v1100
        %v1102 = vrot.slane %v1093, %v1101
        %v1105 = vmul.f32 %v1090, %v1098
        %v1106 = vmul.f32 %v1091, %v1102
        %v1107 = vpack.c.bf16 %v1039, %v1017
        %v1108 = vpack.c.bf16 %v1040, %v1018
        %v1109 = vpack.c.bf16 %v1083, %v1061
        %v1110 = vpack.c.bf16 %v1084, %v1062
        %v1111 = vpack.c.bf16 %v1105, %v1105
        %v1112 = vpack.c.bf16 %v1106, %v1106
        %s1113 = scalar_lea.vmem %s2, 16
        %v1114 = vld [vmem:[%s1113] sm:$0xf]
        %v1116 = vsel %vm577, %v1114, 0
        %v1119 = vsel %vm581, %v1111, 0
        %v1122 = vsel %vm581, %v1112, 0
        %1124 = vmatprep.subr.bf16.mxu0 %v1108
        %1125 = vmatpush1.bf16.msra.mxu0 %v1107
        %1126 = vmatprep.subr.bf16.mxu0 %v1110
        %1127 = vmatpush1.bf16.msra.mxu0 %v1109
        %1128 = vmatprep.subr.bf16.mxu0 %v1122
        %1129 = vmatpush1.bf16.msra.mxu0 %v1119
        %1130 = vmatprep.subr.bf16.mxu0 0
        %1131 = vmatpush1.bf16.msra.mxu0 0
        %1132 = vmatprep.subr.bf16.mxu0 0
        %1133 = vmatpush1.bf16.msra.mxu0 0
        %1134 = vmatprep.subr.bf16.mxu0 0
        %1135 = vmatpush1.bf16.msra.mxu0 0
        %1136 = vmatprep.subr.bf16.mxu0 0
        %1137 = vmatpush1.bf16.msra.mxu0 0
        %1138 = vmatprep.subr.bf16.mxu0 0
        %1139 = vmatpush1.bf16.msra.mxu0 0
        %1140 = vmatprep.subr.bf16.mxu0 0
        %1141 = vmatpush1.bf16.msra.mxu0 0
        %1142 = vmatprep.subr.bf16.mxu0 0
        %1143 = vmatpush1.bf16.msra.mxu0 0
        %1144 = vmatprep.subr.bf16.mxu0 0
        %1145 = vmatpush1.bf16.msra.mxu0 0
        %1146 = vmatprep.subr.bf16.mxu0 0
        %1147 = vmatpush1.bf16.msra.mxu0 0
        %1148 = vmatprep.subr.bf16.mxu0 0
        %1149 = vmatpush1.bf16.msra.mxu0 0
        %1150 = vmatprep.subr.bf16.mxu0 0
        %1151 = vmatpush1.bf16.msra.mxu0 0
        %1152 = vmatprep.subr.bf16.mxu0 0
        %1153 = vmatpush1.bf16.msra.mxu0 0
        %1154 = vmatprep.subr.bf16.mxu0 0
        %1155 = vmatpush1.bf16.msra.mxu0 0
        %1156 = vmatprep.mubr.bf16.mxu0 0
        %1157 = vmatmul.mubr.bf16.gmra.mrb[0].mxu0 %v1116
        %v1158 = vpop.f32.mrb[0].mxu0
        %v1159 = vadd.f32 0.0, %v1158
        %v1160 = vpop.f32.mrb[0].mxu0
        %v1161 = vadd.f32 0.0, %v1160
        %v1162 = vpop.f32.mrb[0].mxu0
        %v1163 = vpop.f32.mrb[0].mxu0
        %1164 = vdwg.mxu0
        %v1165 = vadd.f32 %v995, %v1159
        %v1166 = vadd.f32 %v996, %v1161
        %v1167 = vld [vmem:[%s3] sm:$0xff]
        %1169 = vset.pattern.permute.xlu0 0
        %1170 = vperm.xlu0 %1169, %v1167
        %v1171 = vpop.permute.xlu0 %1170
        %v1173 = vadd.f32 %v1165, %v1171
        %v1174 = vadd.f32 %v1166, %v1171
        %vm1175 = vcmp.gt.f32.partialorder %v1173, 0.0
        %vm1176 = vcmp.gt.f32.partialorder %v1174, 0.0
        %v1177 = vmul.f32 %v1173, 0.01
        %v1178 = vmul.f32 %v1174, 0.01
        %v1179 = vsel %vm1175, %v1173, %v1177
        %v1180 = vsel %vm1176, %v1174, %v1178
        %v1183 = vrot.slane %v1179, 4
        %v1184 = vrot.slane %v1180, 4
        %v1189 = vrot.slane %v339, 4
        %v1190 = vrot.slane %v340, 4
        %v1193 = vsel %vm581, %v339, %v1183
        %v1194 = vsel %vm581, %v340, %v1184
        %v1195 = vsel %vm581, %v1183, %v1189
        %v1196 = vsel %vm581, %v1184, %v1190
        %1197 = vst [vmem:[%s255] sm:$0xff] %v1193
        %1198 = vst [vmem:[%s255 + $0x8] sm:$0xff] %v1194
        %1199 = vst [vmem:[%s255 + $0x10] sm:$0xff] %v1195
        %1200 = vst [vmem:[%s255 + $0x18] sm:$0xff] %v1196
        %s1201 = sand.u32 %s141, 1
        %s1202 = scalar_lea.sflag [#allocation4], %s1201
        %s1203 = sand.u32 %s141, 1
        %s1204 = smul.addr %s1203, 32
        %s1205 = scalar_lea.vmem [#allocation7], %s1204
        // Predicated region
        $region49: #{tpu_custom_call.1} parent=39 // pred_check
          %p1206 = pneg %p151
        $region50: #{tpu_custom_call.1} parent=39 // pred_check_branch
          %1208 = sbr.rel (%p1206) target = $region52
        $region51: #{tpu_custom_call.1} parent=39 // pred_region
          %s1209 = smul.u32 2, %s23
          %s1211 = ssub.s32 512, 512
          %1212 = vsyncadd %s1202, %s1211
          %s1213 = smul.addr %s1209, 128
          %s1214 = scalar_lea.hbm %s5, %s1213
          %s1215 = sshll.u32 %s1205, 4
          %s1216 = int_to_ptr.vmem [resolvable:$true] %s1215
          %1221 = dma.vmem_to_hbm [thread:$0]  %s1216, 512, %s1214, %s1202, 256, 512, 16
        $region52: #{tpu_custom_call.1} parent=39 // pred_fallthru
          _
      $region40: #{tpu_custom_call.1} parent=5 // pred_fallthru
        _
      %p1222 = scmp.le.s32.totalorder 2, %s18
      // Predicated region
      $region53: #{tpu_custom_call.1} parent=5 // pred_check
        %p1223 = pneg %p1222
      $region54: #{tpu_custom_call.1} parent=5 // pred_check_branch
        %1225 = sbr.rel (%p1223) target = $region56
      $region55: #{tpu_custom_call.1} parent=5 // pred_region
        %s1226 = ssub.s32 %s18, 2
        // Predicated region
        $region57: #{tpu_custom_call.1} parent=55 // pred_check
          %p1227 = pneg %p157
        $region58: #{tpu_custom_call.1} parent=55 // pred_check_branch
          %1229 = sbr.rel (%p1227) target = $region60
        $region59: #{tpu_custom_call.1} parent=55 // pred_region
          %s1230 = sand.u32 %s142, 1
          %s1231 = scalar_lea.sflag [#allocation4], %s1230
          %s1232 = sand.u32 %s142, 1
          %s1233 = smul.addr %s1232, 32
          %s1234 = scalar_lea.vmem [#allocation7], %s1233
          %1235 = dma.done %s1231, 512
        $region60: #{tpu_custom_call.1} parent=55 // pred_fallthru
          _
      $region56: #{tpu_custom_call.1} parent=5 // pred_fallthru
        _
    $region6: #{tpu_custom_call.1} parent=1 // loop_footer
      %s22 = sadd.s32 1, %s18
    $region7: #{tpu_custom_call.1} parent=1 // loop_footer_branch
      %17 = sbr.rel target = $region3
    $region8: #{tpu_custom_call.1} parent=1 // loop_exit
      _
    %1236 = vsyncpa [#allocation3], 1
    %s1237 = scalar_lea.sflag [#allocation3], 1
    %1238 = vsyncpa %s1237, 1
    %1239 = vsyncpa [#allocation6], 1
    %1240 = vsyncpa [#allocation4], 1
    %s1241 = scalar_lea.sflag [#allocation4], 1
    %1242 = vsyncpa %s1241, 1

</llo_original>
